<compile_context>
chip_gen: v5e
topology: v5e:2x2
jax: 0.10.0
libtpu: 0.0.40
codegen_flags: <defaults>
</compile_context>

<pallas_src>
import jax
import jax.numpy as jnp
from jax.experimental import pallas as pl
from jax.experimental.pallas import tpu as pltpu

K_TEMP = 25     # temporal conv kernel width
POOL_W = 75     # avg-pool window (time)
POOL_S = 15     # avg-pool stride (time)
BN_EPS = 1e-5   # PyTorch BatchNorm2d default eps

_HI = jax.lax.Precision.HIGHEST      # wrapper-side weight folding only (tiny)

_VMEM_BUDGET = 16 * 1024 * 1024      # working-set target (fits v5e's 16 MiB default)
_VMEM_LIMIT = 32 * 1024 * 1024       # explicit scoped-VMEM limit (2x headroom)


def _round_up(n, m):
    return ((n + m - 1) // m) * m


def _vmem_bytes_estimate(bblk, nCh8, T, T1, Tpq):
    """Rough per-grid-step VMEM footprint (f32, lane/sublane padded)."""
    lane = lambda n: _round_up(n, 128)
    x_blk = 2 * bblk * nCh8 * lane(T) * 4              # double-buffered input block
    o_blk = 2 * bblk * 128 * lane(Tpq) * 4             # double-buffered output block
    slab = (K_TEMP * nCh8) * lane(T1) * 4              # im2col VMEM scratch
    wts = 2 * (128 * lane(K_TEMP * nCh8)               # fused conv weights
               + _round_up(T1, 8) * lane(Tpq)          # pooling indicator matrix
               + 128 * 128 + 2 * 128) * 4              # projection weights + biases
    y_tmp = 4 * 128 * lane(T1) * 4                     # y / ELU / pooled temporaries
    return x_blk + o_blk + slab + wts + y_tmp


def _pick_batch_block(B, nCh8, T, T1, Tpq):
    """Largest batch block that fits the VMEM budget, preferring a deep grid."""
    cands = [c for c in (8, 4, 2, 1)
             if B % c == 0
             and _vmem_bytes_estimate(c, nCh8, T, T1, Tpq) <= _VMEM_BUDGET]
    # Prefer >=4 grid steps (v7x has 2 TensorCores -> >=2 steps/core keeps the
    # DMA/compute pipeline busy), then >=2 steps, then whatever fits.
    for min_steps in (4, 2, 1):
        for c in cands:
            if B // c >= min_steps:
                return c
    return 1


def _patch_embed_kernel(x_ref, wf_ref, bf_ref, pt_ref, wp_ref, bp_ref,
                        o_ref, slab_ref):
    Bblk, nCh8, T = x_ref.shape
    CKa, T1 = slab_ref.shape          # CKa = K_TEMP * nCh8
    for b in range(Bblk):             # unrolled; Bblk kept small by the picker
        xb = x_ref[b]                                            # (nCh8, T)
        # Rebuild the im2col slab in VMEM from K_TEMP shifted copies of the raw
        # input (row block k holds x[:, k:k+T1]); nCh8 is an 8-multiple so every
        # store is sublane-aligned, and channel-pad rows are real zeros.
        for k in range(K_TEMP):
            slab_ref[k * nCh8:(k + 1) * nCh8, :] = xb[:, k:k + T1]
        # Fused temporal (1x25) + spatial (nCh x 1) conv with eval-mode BN and
        # both conv biases folded in: ONE MXU matmul, contraction over (k, c).
        y = jnp.dot(wf_ref[...], slab_ref[...],
                    preferred_element_type=jnp.float32) + bf_ref[...]
        # ELU(alpha=1); the min() guard keeps exp's argument <= 0.
        y = jnp.where(y > 0.0, y, jnp.exp(jnp.minimum(y, 0.0)) - 1.0)
        # AvgPool2d((1,75),(1,15)): per-sample matmul with a 0/1 window
        # indicator (de-kron'd), scaled by 1/75 on the VPU.
        pooled = jnp.dot(y, pt_ref[...],
                         preferred_element_type=jnp.float32) * (1.0 / POOL_W)
        # TODO(synk): Dropout(0.5) is identity in eval mode; training-mode
        # stochastic dropout (pltpu.prng_*) intentionally not implemented.
        # 1x1-conv projection; output stays transposed (emb on sublanes) so all
        # matmuls are standard (M,K)@(K,N); the wrapper transposes back.
        out = jnp.dot(wp_ref[...], pooled,
                      preferred_element_type=jnp.float32) + bp_ref[...]
        o_ref[b] = out.astype(o_ref.dtype)


def make_params(key, nCh, emb_size=40):
    ks = jax.random.split(key, 10)
    p = {}
    p["w1"] = jax.random.normal(ks[0], (40, 1, 1, K_TEMP), jnp.float32) * 0.1
    p["b1"] = jax.random.normal(ks[1], (40,), jnp.float32) * 0.1
    p["w2"] = jax.random.normal(ks[2], (40, 40, nCh, 1), jnp.float32) * 0.05
    p["b2"] = jax.random.normal(ks[3], (40,), jnp.float32) * 0.1
    p["bn_gamma"] = jax.random.uniform(ks[4], (40,), jnp.float32, 0.5, 1.5)
    p["bn_beta"] = jax.random.normal(ks[5], (40,), jnp.float32) * 0.1
    p["bn_mean"] = jax.random.normal(ks[6], (40,), jnp.float32) * 0.1
    p["bn_var"] = jax.random.uniform(ks[7], (40,), jnp.float32, 0.5, 1.5)
    p["wp"] = jax.random.normal(ks[8], (emb_size, 40, 1, 1), jnp.float32) * 0.1
    p["bp"] = jax.random.normal(ks[9], (emb_size,), jnp.float32) * 0.1
    return p


def patch_embedding(x, p):
    """x: (B, 1, nCh, T) float32 (PyTorch NCHW). Returns (B, T_pool, emb)."""
    B, _, nCh, T = x.shape
    F = p["w1"].shape[0]                       # 40 conv filters
    emb = p["wp"].shape[0]
    T1 = T - K_TEMP + 1
    assert T1 >= POOL_W, "input too short for AvgPool2d((1, 75), (1, 15))"
    Tp = (T1 - POOL_W) // POOL_S + 1

    nCh8 = _round_up(nCh, 8)                   # sublane-aligned channel count
    CKa = K_TEMP * nCh8                        # slab rows (contraction dim)
    Fp = _round_up(F, 128)                     # lane/sublane-dense feature dim
    EMBp = _round_up(emb, 128)                 # padded embedding dim
    Tpq = _round_up(Tp, 8)                     # padded pooled-time dim

    # Raw input only (no HBM im2col): zero-pad channels to a sublane multiple.
    xp = jnp.zeros((B, nCh8, T), jnp.float32).at[:, :nCh, :].set(x[:, 0])

    # Fuse temporal + spatial conv weights in (k, c) order (matches the slab
    # layout), fold eval-mode BatchNorm and both conv biases.
    w1 = p["w1"][:, 0, 0, :]                                     # (F, K)      [g, k]
    w2 = p["w2"][:, :, :, 0]                                     # (F, F, nCh) [f, g, c]
    wf = jnp.einsum('gk,fgc->fkc', w1, w2, precision=_HI)        # (F, K, nCh)
    scale = p["bn_gamma"] * jax.lax.rsqrt(p["bn_var"] + BN_EPS)
    bf_raw = jnp.einsum('g,fgc->f', p["b1"], w2, precision=_HI) + p["b2"]
    bias = (bf_raw - p["bn_mean"]) * scale + p["bn_beta"]
    wfT = jnp.zeros((Fp, K_TEMP, nCh8), jnp.float32)
    wfT = wfT.at[:F, :, :nCh].set(wf * scale[:, None, None]).reshape(Fp, CKa)
    bfT = jnp.zeros((Fp, 1), jnp.float32).at[:F, 0].set(bias)

    # AvgPool window-indicator matrix (single sample, no kron; 1/75 in-kernel).
    t_idx = jnp.arange(T1)[:, None]
    q_idx = jnp.arange(Tpq)[None, :]
    pT = ((t_idx >= q_idx * POOL_S) & (t_idx < q_idx * POOL_S + POOL_W)
          & (q_idx < Tp)).astype(jnp.float32)                    # (T1, Tpq)

    # Projection weights/bias; kernel writes the output transposed (emb, time).
    wpT = jnp.zeros((EMBp, Fp), jnp.float32).at[:emb, :F].set(p["wp"][:, :, 0, 0])
    bpT = jnp.zeros((EMBp, 1), jnp.float32).at[:emb, 0].set(p["bp"])

    Bblk = _pick_batch_block(B, nCh8, T, T1, Tpq)
    out_t = pl.pallas_call(
        _patch_embed_kernel,
        grid=(B // Bblk,),
        in_specs=[
            pl.BlockSpec((Bblk, nCh8, T), lambda i: (i, 0, 0)),   # raw input block
            pl.BlockSpec((Fp, CKa), lambda i: (0, 0)),            # fused conv weights
            pl.BlockSpec((Fp, 1), lambda i: (0, 0)),              # fused conv bias
            pl.BlockSpec((T1, Tpq), lambda i: (0, 0)),            # pooling indicator
            pl.BlockSpec((EMBp, Fp), lambda i: (0, 0)),           # projection weights
            pl.BlockSpec((EMBp, 1), lambda i: (0, 0)),            # projection bias
        ],
        out_specs=pl.BlockSpec((Bblk, EMBp, Tpq), lambda i: (i, 0, 0)),
        out_shape=jax.ShapeDtypeStruct((B, EMBp, Tpq), jnp.float32),
        scratch_shapes=[pltpu.VMEM((CKa, T1), jnp.float32)],      # im2col slab
        compiler_params=pltpu.CompilerParams(
            dimension_semantics=("parallel",),
            vmem_limit_bytes=_VMEM_LIMIT),
    )(xp, wfT, bfT, pT, wpT, bpT)

    # (B, emb_pad, time_pad) -> (B, Tp, emb).  Padded time columns hold the
    # projection bias and padded emb rows hold zeros; both are stripped here.
    return jnp.transpose(out_t, (0, 2, 1))[:, :Tp, :emb]


def reference(x, p):
    """Pure-JAX reference mirroring the PyTorch module in eval mode (f32)."""
    xs = x[:, 0]
    B, nCh, T = xs.shape
    T1 = T - K_TEMP + 1
    cols = jnp.stack([xs[:, :, k:k + T1] for k in range(K_TEMP)], axis=-1)
    out1 = jnp.einsum('bctk,fk->bfct', cols, p["w1"][:, 0, 0, :], precision=_HI) \
        + p["b1"][None, :, None, None]
    out2 = jnp.einsum('bgct,fgc->bft', out1, p["w2"][:, :, :, 0], precision=_HI) \
        + p["b2"][None, :, None]
    scale = p["bn_gamma"] / jnp.sqrt(p["bn_var"] + BN_EPS)
    y = (out2 - p["bn_mean"][None, :, None]) * scale[None, :, None] \
        + p["bn_beta"][None, :, None]
    y = jnp.where(y > 0, y, jnp.exp(jnp.minimum(y, 0.0)) - 1.0)
    Tp = (T1 - POOL_W) // POOL_S + 1
    pooled = jnp.stack(
        [jnp.mean(y[:, :, q * POOL_S:q * POOL_S + POOL_W], axis=-1) for q in range(Tp)],
        axis=-1)                                                     # (B, F, Tp)
    proj = jnp.einsum('bft,ef->bet', pooled, p["wp"][:, :, 0, 0], precision=_HI) \
        + p["bp"][None, :, None]
    return jnp.transpose(proj, (0, 2, 1))                            # (B, Tp, emb)


if __name__ == "__main__":
    key = jax.random.PRNGKey(0)
    kx, kp = jax.random.split(key)

    B, nCh, T, emb = 8, 4, 129, 40      # small shapes; T=129 -> T1=105 -> Tp=3
    x = jax.random.normal(kx, (B, 1, nCh, T), jnp.float32)
    params = make_params(kp, nCh, emb)

    out = jax.block_until_ready(patch_embedding(x, params))
    ref = jax.block_until_ready(reference(x, params))

    Tp = (T - K_TEMP + 1 - POOL_W) // POOL_S + 1
    assert out.shape == (B, Tp, emb), out.shape
    err = jnp.abs(out - ref)
    max_err = float(jnp.max(err))
    mean_err = float(jnp.mean(err))
    # Kernel matmuls run at DEFAULT (single bf16-pass, f32-accumulate) MXU
    # precision per the perf review, so the pure-f32 reference differs by
    # O(1e-3); real structural bugs show up as O(0.1 - 1) errors.
    assert max_err < 3e-2 and mean_err < 5e-3, (max_err, mean_err)
    print("KERNEL_OK")
</pallas_src>

<mosaic_0001>
module attributes {stable_mosaic.version = 11 : i64} {
  func.func @_patch_embed_kernel(%arg0: i32, %arg1: memref<2x8x129xf32, #tpu.memory_space<vmem>>, %arg2: memref<128x200xf32, #tpu.memory_space<vmem>>, %arg3: memref<128x1xf32, #tpu.memory_space<vmem>>, %arg4: memref<105x8xf32, #tpu.memory_space<vmem>>, %arg5: memref<128x128xf32, #tpu.memory_space<vmem>>, %arg6: memref<128x1xf32, #tpu.memory_space<vmem>>, %arg7: memref<2x128x8xf32, #tpu.memory_space<vmem>>, %arg8: memref<200x105xf32, #tpu.memory_space<vmem>>) attributes {dimension_semantics = [#tpu.dimension_semantics<parallel>], iteration_bounds = array<i64: 4>, scalar_prefetch = 0 : i64, scratch_operands = 1 : i64, tpu.core_type = #tpu.core_type<tc>, window_params = [{transform_indices = @transform_0, window_bounds = array<i64: 2, 8, 129>}, {pipeline_mode = #tpu.pipeline_mode<synchronous>, transform_indices = @transform_1, window_bounds = array<i64: 128, 200>}, {pipeline_mode = #tpu.pipeline_mode<synchronous>, transform_indices = @transform_2, window_bounds = array<i64: 128, 1>}, {pipeline_mode = #tpu.pipeline_mode<synchronous>, transform_indices = @transform_3, window_bounds = array<i64: 105, 8>}, {pipeline_mode = #tpu.pipeline_mode<synchronous>, transform_indices = @transform_4, window_bounds = array<i64: 128, 128>}, {pipeline_mode = #tpu.pipeline_mode<synchronous>, transform_indices = @transform_5, window_bounds = array<i64: 128, 1>}, {transform_indices = @transform_6, window_bounds = array<i64: 2, 128, 8>}]} {
    %c0 = arith.constant 0 : index
    %c0_0 = arith.constant 0 : index
    %c0_1 = arith.constant 0 : index
    %0 = vector.load %arg1[%c0, %c0_0, %c0_1] : memref<2x8x129xf32, #tpu.memory_space<vmem>>, vector<1x8x129xf32>
    %1 = vector.shape_cast %0 : vector<1x8x129xf32> to vector<8x129xf32>
    %2 = vector.extract_strided_slice %1 {offsets = [0, 0], sizes = [8, 105], strides = [1, 1]} : vector<8x129xf32> to vector<8x105xf32>
    %c0_2 = arith.constant 0 : index
    %c0_3 = arith.constant 0 : index
    %3 = vector.load %arg8[%c0_2, %c0_3] : memref<200x105xf32, #tpu.memory_space<vmem>>, vector<8x105xf32>
    tpu.vector_store %arg8[%c0_2, %c0_3], %2 {strides = array<i32>} : memref<200x105xf32, #tpu.memory_space<vmem>>, vector<8x105xf32>,
    %4 = vector.extract_strided_slice %1 {offsets = [0, 1], sizes = [8, 105], strides = [1, 1]} : vector<8x129xf32> to vector<8x105xf32>
    %c8 = arith.constant 8 : index
    %c0_4 = arith.constant 0 : index
    %5 = vector.load %arg8[%c8, %c0_4] : memref<200x105xf32, #tpu.memory_space<vmem>>, vector<8x105xf32>
    tpu.vector_store %arg8[%c8, %c0_4], %4 {strides = array<i32>} : memref<200x105xf32, #tpu.memory_space<vmem>>, vector<8x105xf32>,
    %6 = vector.extract_strided_slice %1 {offsets = [0, 2], sizes = [8, 105], strides = [1, 1]} : vector<8x129xf32> to vector<8x105xf32>
    %c16 = arith.constant 16 : index
    %c0_5 = arith.constant 0 : index
    %7 = vector.load %arg8[%c16, %c0_5] : memref<200x105xf32, #tpu.memory_space<vmem>>, vector<8x105xf32>
    tpu.vector_store %arg8[%c16, %c0_5], %6 {strides = array<i32>} : memref<200x105xf32, #tpu.memory_space<vmem>>, vector<8x105xf32>,
    %8 = vector.extract_strided_slice %1 {offsets = [0, 3], sizes = [8, 105], strides = [1, 1]} : vector<8x129xf32> to vector<8x105xf32>
    %c24 = arith.constant 24 : index
    %c0_6 = arith.constant 0 : index
    %9 = vector.load %arg8[%c24, %c0_6] : memref<200x105xf32, #tpu.memory_space<vmem>>, vector<8x105xf32>
    tpu.vector_store %arg8[%c24, %c0_6], %8 {strides = array<i32>} : memref<200x105xf32, #tpu.memory_space<vmem>>, vector<8x105xf32>,
    %10 = vector.extract_strided_slice %1 {offsets = [0, 4], sizes = [8, 105], strides = [1, 1]} : vector<8x129xf32> to vector<8x105xf32>
    %c32 = arith.constant 32 : index
    %c0_7 = arith.constant 0 : index
    %11 = vector.load %arg8[%c32, %c0_7] : memref<200x105xf32, #tpu.memory_space<vmem>>, vector<8x105xf32>
    tpu.vector_store %arg8[%c32, %c0_7], %10 {strides = array<i32>} : memref<200x105xf32, #tpu.memory_space<vmem>>, vector<8x105xf32>,
    %12 = vector.extract_strided_slice %1 {offsets = [0, 5], sizes = [8, 105], strides = [1, 1]} : vector<8x129xf32> to vector<8x105xf32>
    %c40 = arith.constant 40 : index
    %c0_8 = arith.constant 0 : index
    %13 = vector.load %arg8[%c40, %c0_8] : memref<200x105xf32, #tpu.memory_space<vmem>>, vector<8x105xf32>
    tpu.vector_store %arg8[%c40, %c0_8], %12 {strides = array<i32>} : memref<200x105xf32, #tpu.memory_space<vmem>>, vector<8x105xf32>,
    %14 = vector.extract_strided_slice %1 {offsets = [0, 6], sizes = [8, 105], strides = [1, 1]} : vector<8x129xf32> to vector<8x105xf32>
    %c48 = arith.constant 48 : index
    %c0_9 = arith.constant 0 : index
    %15 = vector.load %arg8[%c48, %c0_9] : memref<200x105xf32, #tpu.memory_space<vmem>>, vector<8x105xf32>
    tpu.vector_store %arg8[%c48, %c0_9], %14 {strides = array<i32>} : memref<200x105xf32, #tpu.memory_space<vmem>>, vector<8x105xf32>,
    %16 = vector.extract_strided_slice %1 {offsets = [0, 7], sizes = [8, 105], strides = [1, 1]} : vector<8x129xf32> to vector<8x105xf32>
    %c56 = arith.constant 56 : index
    %c0_10 = arith.constant 0 : index
    %17 = vector.load %arg8[%c56, %c0_10] : memref<200x105xf32, #tpu.memory_space<vmem>>, vector<8x105xf32>
    tpu.vector_store %arg8[%c56, %c0_10], %16 {strides = array<i32>} : memref<200x105xf32, #tpu.memory_space<vmem>>, vector<8x105xf32>,
    %18 = vector.extract_strided_slice %1 {offsets = [0, 8], sizes = [8, 105], strides = [1, 1]} : vector<8x129xf32> to vector<8x105xf32>
    %c64 = arith.constant 64 : index
    %c0_11 = arith.constant 0 : index
    %19 = vector.load %arg8[%c64, %c0_11] : memref<200x105xf32, #tpu.memory_space<vmem>>, vector<8x105xf32>
    tpu.vector_store %arg8[%c64, %c0_11], %18 {strides = array<i32>} : memref<200x105xf32, #tpu.memory_space<vmem>>, vector<8x105xf32>,
    %20 = vector.extract_strided_slice %1 {offsets = [0, 9], sizes = [8, 105], strides = [1, 1]} : vector<8x129xf32> to vector<8x105xf32>
    %c72 = arith.constant 72 : index
    %c0_12 = arith.constant 0 : index
    %21 = vector.load %arg8[%c72, %c0_12] : memref<200x105xf32, #tpu.memory_space<vmem>>, vector<8x105xf32>
    tpu.vector_store %arg8[%c72, %c0_12], %20 {strides = array<i32>} : memref<200x105xf32, #tpu.memory_space<vmem>>, vector<8x105xf32>,
    %22 = vector.extract_strided_slice %1 {offsets = [0, 10], sizes = [8, 105], strides = [1, 1]} : vector<8x129xf32> to vector<8x105xf32>
    %c80 = arith.constant 80 : index
    %c0_13 = arith.constant 0 : index
    %23 = vector.load %arg8[%c80, %c0_13] : memref<200x105xf32, #tpu.memory_space<vmem>>, vector<8x105xf32>
    tpu.vector_store %arg8[%c80, %c0_13], %22 {strides = array<i32>} : memref<200x105xf32, #tpu.memory_space<vmem>>, vector<8x105xf32>,
    %24 = vector.extract_strided_slice %1 {offsets = [0, 11], sizes = [8, 105], strides = [1, 1]} : vector<8x129xf32> to vector<8x105xf32>
    %c88 = arith.constant 88 : index
    %c0_14 = arith.constant 0 : index
    %25 = vector.load %arg8[%c88, %c0_14] : memref<200x105xf32, #tpu.memory_space<vmem>>, vector<8x105xf32>
    tpu.vector_store %arg8[%c88, %c0_14], %24 {strides = array<i32>} : memref<200x105xf32, #tpu.memory_space<vmem>>, vector<8x105xf32>,
    %26 = vector.extract_strided_slice %1 {offsets = [0, 12], sizes = [8, 105], strides = [1, 1]} : vector<8x129xf32> to vector<8x105xf32>
    %c96 = arith.constant 96 : index
    %c0_15 = arith.constant 0 : index
    %27 = vector.load %arg8[%c96, %c0_15] : memref<200x105xf32, #tpu.memory_space<vmem>>, vector<8x105xf32>
    tpu.vector_store %arg8[%c96, %c0_15], %26 {strides = array<i32>} : memref<200x105xf32, #tpu.memory_space<vmem>>, vector<8x105xf32>,
    %28 = vector.extract_strided_slice %1 {offsets = [0, 13], sizes = [8, 105], strides = [1, 1]} : vector<8x129xf32> to vector<8x105xf32>
    %c104 = arith.constant 104 : index
    %c0_16 = arith.constant 0 : index
    %29 = vector.load %arg8[%c104, %c0_16] : memref<200x105xf32, #tpu.memory_space<vmem>>, vector<8x105xf32>
    tpu.vector_store %arg8[%c104, %c0_16], %28 {strides = array<i32>} : memref<200x105xf32, #tpu.memory_space<vmem>>, vector<8x105xf32>,
    %30 = vector.extract_strided_slice %1 {offsets = [0, 14], sizes = [8, 105], strides = [1, 1]} : vector<8x129xf32> to vector<8x105xf32>
    %c112 = arith.constant 112 : index
    %c0_17 = arith.constant 0 : index
    %31 = vector.load %arg8[%c112, %c0_17] : memref<200x105xf32, #tpu.memory_space<vmem>>, vector<8x105xf32>
    tpu.vector_store %arg8[%c112, %c0_17], %30 {strides = array<i32>} : memref<200x105xf32, #tpu.memory_space<vmem>>, vector<8x105xf32>,
    %32 = vector.extract_strided_slice %1 {offsets = [0, 15], sizes = [8, 105], strides = [1, 1]} : vector<8x129xf32> to vector<8x105xf32>
    %c120 = arith.constant 120 : index
    %c0_18 = arith.constant 0 : index
    %33 = vector.load %arg8[%c120, %c0_18] : memref<200x105xf32, #tpu.memory_space<vmem>>, vector<8x105xf32>
    tpu.vector_store %arg8[%c120, %c0_18], %32 {strides = array<i32>} : memref<200x105xf32, #tpu.memory_space<vmem>>, vector<8x105xf32>,
    %34 = vector.extract_strided_slice %1 {offsets = [0, 16], sizes = [8, 105], strides = [1, 1]} : vector<8x129xf32> to vector<8x105xf32>
    %c128 = arith.constant 128 : index
    %c0_19 = arith.constant 0 : index
    %35 = vector.load %arg8[%c128, %c0_19] : memref<200x105xf32, #tpu.memory_space<vmem>>, vector<8x105xf32>
    tpu.vector_store %arg8[%c128, %c0_19], %34 {strides = array<i32>} : memref<200x105xf32, #tpu.memory_space<vmem>>, vector<8x105xf32>,
    %36 = vector.extract_strided_slice %1 {offsets = [0, 17], sizes = [8, 105], strides = [1, 1]} : vector<8x129xf32> to vector<8x105xf32>
    %c136 = arith.constant 136 : index
    %c0_20 = arith.constant 0 : index
    %37 = vector.load %arg8[%c136, %c0_20] : memref<200x105xf32, #tpu.memory_space<vmem>>, vector<8x105xf32>
    tpu.vector_store %arg8[%c136, %c0_20], %36 {strides = array<i32>} : memref<200x105xf32, #tpu.memory_space<vmem>>, vector<8x105xf32>,
    %38 = vector.extract_strided_slice %1 {offsets = [0, 18], sizes = [8, 105], strides = [1, 1]} : vector<8x129xf32> to vector<8x105xf32>
    %c144 = arith.constant 144 : index
    %c0_21 = arith.constant 0 : index
    %39 = vector.load %arg8[%c144, %c0_21] : memref<200x105xf32, #tpu.memory_space<vmem>>, vector<8x105xf32>
    tpu.vector_store %arg8[%c144, %c0_21], %38 {strides = array<i32>} : memref<200x105xf32, #tpu.memory_space<vmem>>, vector<8x105xf32>,
    %40 = vector.extract_strided_slice %1 {offsets = [0, 19], sizes = [8, 105], strides = [1, 1]} : vector<8x129xf32> to vector<8x105xf32>
    %c152 = arith.constant 152 : index
    %c0_22 = arith.constant 0 : index
    %41 = vector.load %arg8[%c152, %c0_22] : memref<200x105xf32, #tpu.memory_space<vmem>>, vector<8x105xf32>
    tpu.vector_store %arg8[%c152, %c0_22], %40 {strides = array<i32>} : memref<200x105xf32, #tpu.memory_space<vmem>>, vector<8x105xf32>,
    %42 = vector.extract_strided_slice %1 {offsets = [0, 20], sizes = [8, 105], strides = [1, 1]} : vector<8x129xf32> to vector<8x105xf32>
    %c160 = arith.constant 160 : index
    %c0_23 = arith.constant 0 : index
    %43 = vector.load %arg8[%c160, %c0_23] : memref<200x105xf32, #tpu.memory_space<vmem>>, vector<8x105xf32>
    tpu.vector_store %arg8[%c160, %c0_23], %42 {strides = array<i32>} : memref<200x105xf32, #tpu.memory_space<vmem>>, vector<8x105xf32>,
    %44 = vector.extract_strided_slice %1 {offsets = [0, 21], sizes = [8, 105], strides = [1, 1]} : vector<8x129xf32> to vector<8x105xf32>
    %c168 = arith.constant 168 : index
    %c0_24 = arith.constant 0 : index
    %45 = vector.load %arg8[%c168, %c0_24] : memref<200x105xf32, #tpu.memory_space<vmem>>, vector<8x105xf32>
    tpu.vector_store %arg8[%c168, %c0_24], %44 {strides = array<i32>} : memref<200x105xf32, #tpu.memory_space<vmem>>, vector<8x105xf32>,
    %46 = vector.extract_strided_slice %1 {offsets = [0, 22], sizes = [8, 105], strides = [1, 1]} : vector<8x129xf32> to vector<8x105xf32>
    %c176 = arith.constant 176 : index
    %c0_25 = arith.constant 0 : index
    %47 = vector.load %arg8[%c176, %c0_25] : memref<200x105xf32, #tpu.memory_space<vmem>>, vector<8x105xf32>
    tpu.vector_store %arg8[%c176, %c0_25], %46 {strides = array<i32>} : memref<200x105xf32, #tpu.memory_space<vmem>>, vector<8x105xf32>,
    %48 = vector.extract_strided_slice %1 {offsets = [0, 23], sizes = [8, 105], strides = [1, 1]} : vector<8x129xf32> to vector<8x105xf32>
    %c184 = arith.constant 184 : index
    %c0_26 = arith.constant 0 : index
    %49 = vector.load %arg8[%c184, %c0_26] : memref<200x105xf32, #tpu.memory_space<vmem>>, vector<8x105xf32>
    tpu.vector_store %arg8[%c184, %c0_26], %48 {strides = array<i32>} : memref<200x105xf32, #tpu.memory_space<vmem>>, vector<8x105xf32>,
    %50 = vector.extract_strided_slice %1 {offsets = [0, 24], sizes = [8, 105], strides = [1, 1]} : vector<8x129xf32> to vector<8x105xf32>
    %c192 = arith.constant 192 : index
    %c0_27 = arith.constant 0 : index
    %51 = vector.load %arg8[%c192, %c0_27] : memref<200x105xf32, #tpu.memory_space<vmem>>, vector<8x105xf32>
    tpu.vector_store %arg8[%c192, %c0_27], %50 {strides = array<i32>} : memref<200x105xf32, #tpu.memory_space<vmem>>, vector<8x105xf32>,
    %c0_28 = arith.constant 0 : index
    %c0_29 = arith.constant 0 : index
    %52 = vector.load %arg2[%c0_28, %c0_29] : memref<128x200xf32, #tpu.memory_space<vmem>>, vector<128x200xf32>
    %c0_30 = arith.constant 0 : index
    %c0_31 = arith.constant 0 : index
    %53 = vector.load %arg8[%c0_30, %c0_31] : memref<200x105xf32, #tpu.memory_space<vmem>>, vector<200x105xf32>
    %cst = arith.constant dense<0.000000e+00> : vector<128x105xf32>
    %54 = tpu.matmul %52, %53, %cst {dimension_numbers = #tpu.dot_dimension_numbers<[1], [0], [0], [1], [0, 0, 1, 1], [], []>} : vector<128x200xf32>, vector<200x105xf32>, vector<128x105xf32> -> vector<128x105xf32>
    %c0_32 = arith.constant 0 : index
    %c0_33 = arith.constant 0 : index
    %55 = vector.load %arg3[%c0_32, %c0_33] : memref<128x1xf32, #tpu.memory_space<vmem>>, vector<128x1xf32>
    %56 = vector.broadcast %55 : vector<128x1xf32> to vector<128x105xf32>
    %57 = arith.addf %54, %56 : vector<128x105xf32>
    %cst_34 = arith.constant 0.000000e+00 : f32
    %58 = vector.broadcast %cst_34 : f32 to vector<128x105xf32>
    %59 = arith.cmpf ogt, %57, %58 : vector<128x105xf32>
    %cst_35 = arith.constant 0.000000e+00 : f32
    %60 = vector.broadcast %cst_35 : f32 to vector<128x105xf32>
    %61 = arith.minimumf %57, %60 : vector<128x105xf32>
    %62 = math.exp %61 : vector<128x105xf32>
    %cst_36 = arith.constant 1.000000e+00 : f32
    %63 = vector.broadcast %cst_36 : f32 to vector<128x105xf32>
    %64 = arith.subf %62, %63 : vector<128x105xf32>
    %65 = arith.select %59, %57, %64 : vector<128x105xi1>, vector<128x105xf32>
    %c0_37 = arith.constant 0 : index
    %c0_38 = arith.constant 0 : index
    %66 = vector.load %arg4[%c0_37, %c0_38] : memref<105x8xf32, #tpu.memory_space<vmem>>, vector<105x8xf32>
    %cst_39 = arith.constant dense<0.000000e+00> : vector<128x8xf32>
    %67 = tpu.matmul %65, %66, %cst_39 {dimension_numbers = #tpu.dot_dimension_numbers<[1], [0], [0], [1], [0, 0, 1, 1], [], []>} : vector<128x105xf32>, vector<105x8xf32>, vector<128x8xf32> -> vector<128x8xf32>
    %cst_40 = arith.constant 0.0133333337 : f32
    %68 = vector.broadcast %cst_40 : f32 to vector<128x8xf32>
    %69 = arith.mulf %67, %68 : vector<128x8xf32>
    %c0_41 = arith.constant 0 : index
    %c0_42 = arith.constant 0 : index
    %70 = vector.load %arg5[%c0_41, %c0_42] : memref<128x128xf32, #tpu.memory_space<vmem>>, vector<128x128xf32>
    %cst_43 = arith.constant dense<0.000000e+00> : vector<128x8xf32>
    %71 = tpu.matmul %70, %69, %cst_43 {dimension_numbers = #tpu.dot_dimension_numbers<[1], [0], [0], [1], [0, 0, 1, 1], [], []>} : vector<128x128xf32>, vector<128x8xf32>, vector<128x8xf32> -> vector<128x8xf32>
    %c0_44 = arith.constant 0 : index
    %c0_45 = arith.constant 0 : index
    %72 = vector.load %arg6[%c0_44, %c0_45] : memref<128x1xf32, #tpu.memory_space<vmem>>, vector<128x1xf32>
    %73 = vector.broadcast %72 : vector<128x1xf32> to vector<128x8xf32>
    %74 = arith.addf %71, %73 : vector<128x8xf32>
    %c0_46 = arith.constant 0 : index
    %c0_47 = arith.constant 0 : index
    %c0_48 = arith.constant 0 : index
    %75 = vector.load %arg7[%c0_46, %c0_47, %c0_48] : memref<2x128x8xf32, #tpu.memory_space<vmem>>, vector<1x128x8xf32>
    %76 = vector.shape_cast %75 : vector<1x128x8xf32> to vector<128x8xf32>
    %77 = vector.shape_cast %74 : vector<128x8xf32> to vector<1x128x8xf32>
    tpu.vector_store %arg7[%c0_46, %c0_47, %c0_48], %77 {strides = array<i32>} : memref<2x128x8xf32, #tpu.memory_space<vmem>>, vector<1x128x8xf32>,
    %c1 = arith.constant 1 : index
    %c0_49 = arith.constant 0 : index
    %c0_50 = arith.constant 0 : index
    %78 = vector.load %arg1[%c1, %c0_49, %c0_50] : memref<2x8x129xf32, #tpu.memory_space<vmem>>, vector<1x8x129xf32>
    %79 = vector.shape_cast %78 : vector<1x8x129xf32> to vector<8x129xf32>
    %80 = vector.extract_strided_slice %79 {offsets = [0, 0], sizes = [8, 105], strides = [1, 1]} : vector<8x129xf32> to vector<8x105xf32>
    %c0_51 = arith.constant 0 : index
    %c0_52 = arith.constant 0 : index
    %81 = vector.load %arg8[%c0_51, %c0_52] : memref<200x105xf32, #tpu.memory_space<vmem>>, vector<8x105xf32>
    tpu.vector_store %arg8[%c0_51, %c0_52], %80 {strides = array<i32>} : memref<200x105xf32, #tpu.memory_space<vmem>>, vector<8x105xf32>,
    %82 = vector.extract_strided_slice %79 {offsets = [0, 1], sizes = [8, 105], strides = [1, 1]} : vector<8x129xf32> to vector<8x105xf32>
    %c8_53 = arith.constant 8 : index
    %c0_54 = arith.constant 0 : index
    %83 = vector.load %arg8[%c8_53, %c0_54] : memref<200x105xf32, #tpu.memory_space<vmem>>, vector<8x105xf32>
    tpu.vector_store %arg8[%c8_53, %c0_54], %82 {strides = array<i32>} : memref<200x105xf32, #tpu.memory_space<vmem>>, vector<8x105xf32>,
    %84 = vector.extract_strided_slice %79 {offsets = [0, 2], sizes = [8, 105], strides = [1, 1]} : vector<8x129xf32> to vector<8x105xf32>
    %c16_55 = arith.constant 16 : index
    %c0_56 = arith.constant 0 : index
    %85 = vector.load %arg8[%c16_55, %c0_56] : memref<200x105xf32, #tpu.memory_space<vmem>>, vector<8x105xf32>
    tpu.vector_store %arg8[%c16_55, %c0_56], %84 {strides = array<i32>} : memref<200x105xf32, #tpu.memory_space<vmem>>, vector<8x105xf32>,
    %86 = vector.extract_strided_slice %79 {offsets = [0, 3], sizes = [8, 105], strides = [1, 1]} : vector<8x129xf32> to vector<8x105xf32>
    %c24_57 = arith.constant 24 : index
    %c0_58 = arith.constant 0 : index
    %87 = vector.load %arg8[%c24_57, %c0_58] : memref<200x105xf32, #tpu.memory_space<vmem>>, vector<8x105xf32>
    tpu.vector_store %arg8[%c24_57, %c0_58], %86 {strides = array<i32>} : memref<200x105xf32, #tpu.memory_space<vmem>>, vector<8x105xf32>,
    %88 = vector.extract_strided_slice %79 {offsets = [0, 4], sizes = [8, 105], strides = [1, 1]} : vector<8x129xf32> to vector<8x105xf32>
    %c32_59 = arith.constant 32 : index
    %c0_60 = arith.constant 0 : index
    %89 = vector.load %arg8[%c32_59, %c0_60] : memref<200x105xf32, #tpu.memory_space<vmem>>, vector<8x105xf32>
    tpu.vector_store %arg8[%c32_59, %c0_60], %88 {strides = array<i32>} : memref<200x105xf32, #tpu.memory_space<vmem>>, vector<8x105xf32>,
    %90 = vector.extract_strided_slice %79 {offsets = [0, 5], sizes = [8, 105], strides = [1, 1]} : vector<8x129xf32> to vector<8x105xf32>
    %c40_61 = arith.constant 40 : index
    %c0_62 = arith.constant 0 : index
    %91 = vector.load %arg8[%c40_61, %c0_62] : memref<200x105xf32, #tpu.memory_space<vmem>>, vector<8x105xf32>
    tpu.vector_store %arg8[%c40_61, %c0_62], %90 {strides = array<i32>} : memref<200x105xf32, #tpu.memory_space<vmem>>, vector<8x105xf32>,
    %92 = vector.extract_strided_slice %79 {offsets = [0, 6], sizes = [8, 105], strides = [1, 1]} : vector<8x129xf32> to vector<8x105xf32>
    %c48_63 = arith.constant 48 : index
    %c0_64 = arith.constant 0 : index
    %93 = vector.load %arg8[%c48_63, %c0_64] : memref<200x105xf32, #tpu.memory_space<vmem>>, vector<8x105xf32>
    tpu.vector_store %arg8[%c48_63, %c0_64], %92 {strides = array<i32>} : memref<200x105xf32, #tpu.memory_space<vmem>>, vector<8x105xf32>,
    %94 = vector.extract_strided_slice %79 {offsets = [0, 7], sizes = [8, 105], strides = [1, 1]} : vector<8x129xf32> to vector<8x105xf32>
    %c56_65 = arith.constant 56 : index
    %c0_66 = arith.constant 0 : index
    %95 = vector.load %arg8[%c56_65, %c0_66] : memref<200x105xf32, #tpu.memory_space<vmem>>, vector<8x105xf32>
    tpu.vector_store %arg8[%c56_65, %c0_66], %94 {strides = array<i32>} : memref<200x105xf32, #tpu.memory_space<vmem>>, vector<8x105xf32>,
    %96 = vector.extract_strided_slice %79 {offsets = [0, 8], sizes = [8, 105], strides = [1, 1]} : vector<8x129xf32> to vector<8x105xf32>
    %c64_67 = arith.constant 64 : index
    %c0_68 = arith.constant 0 : index
    %97 = vector.load %arg8[%c64_67, %c0_68] : memref<200x105xf32, #tpu.memory_space<vmem>>, vector<8x105xf32>
    tpu.vector_store %arg8[%c64_67, %c0_68], %96 {strides = array<i32>} : memref<200x105xf32, #tpu.memory_space<vmem>>, vector<8x105xf32>,
    %98 = vector.extract_strided_slice %79 {offsets = [0, 9], sizes = [8, 105], strides = [1, 1]} : vector<8x129xf32> to vector<8x105xf32>
    %c72_69 = arith.constant 72 : index
    %c0_70 = arith.constant 0 : index
    %99 = vector.load %arg8[%c72_69, %c0_70] : memref<200x105xf32, #tpu.memory_space<vmem>>, vector<8x105xf32>
    tpu.vector_store %arg8[%c72_69, %c0_70], %98 {strides = array<i32>} : memref<200x105xf32, #tpu.memory_space<vmem>>, vector<8x105xf32>,
    %100 = vector.extract_strided_slice %79 {offsets = [0, 10], sizes = [8, 105], strides = [1, 1]} : vector<8x129xf32> to vector<8x105xf32>
    %c80_71 = arith.constant 80 : index
    %c0_72 = arith.constant 0 : index
    %101 = vector.load %arg8[%c80_71, %c0_72] : memref<200x105xf32, #tpu.memory_space<vmem>>, vector<8x105xf32>
    tpu.vector_store %arg8[%c80_71, %c0_72], %100 {strides = array<i32>} : memref<200x105xf32, #tpu.memory_space<vmem>>, vector<8x105xf32>,
    %102 = vector.extract_strided_slice %79 {offsets = [0, 11], sizes = [8, 105], strides = [1, 1]} : vector<8x129xf32> to vector<8x105xf32>
    %c88_73 = arith.constant 88 : index
    %c0_74 = arith.constant 0 : index
    %103 = vector.load %arg8[%c88_73, %c0_74] : memref<200x105xf32, #tpu.memory_space<vmem>>, vector<8x105xf32>
    tpu.vector_store %arg8[%c88_73, %c0_74], %102 {strides = array<i32>} : memref<200x105xf32, #tpu.memory_space<vmem>>, vector<8x105xf32>,
    %104 = vector.extract_strided_slice %79 {offsets = [0, 12], sizes = [8, 105], strides = [1, 1]} : vector<8x129xf32> to vector<8x105xf32>
    %c96_75 = arith.constant 96 : index
    %c0_76 = arith.constant 0 : index
    %105 = vector.load %arg8[%c96_75, %c0_76] : memref<200x105xf32, #tpu.memory_space<vmem>>, vector<8x105xf32>
    tpu.vector_store %arg8[%c96_75, %c0_76], %104 {strides = array<i32>} : memref<200x105xf32, #tpu.memory_space<vmem>>, vector<8x105xf32>,
    %106 = vector.extract_strided_slice %79 {offsets = [0, 13], sizes = [8, 105], strides = [1, 1]} : vector<8x129xf32> to vector<8x105xf32>
    %c104_77 = arith.constant 104 : index
    %c0_78 = arith.constant 0 : index
    %107 = vector.load %arg8[%c104_77, %c0_78] : memref<200x105xf32, #tpu.memory_space<vmem>>, vector<8x105xf32>
    tpu.vector_store %arg8[%c104_77, %c0_78], %106 {strides = array<i32>} : memref<200x105xf32, #tpu.memory_space<vmem>>, vector<8x105xf32>,
    %108 = vector.extract_strided_slice %79 {offsets = [0, 14], sizes = [8, 105], strides = [1, 1]} : vector<8x129xf32> to vector<8x105xf32>
    %c112_79 = arith.constant 112 : index
    %c0_80 = arith.constant 0 : index
    %109 = vector.load %arg8[%c112_79, %c0_80] : memref<200x105xf32, #tpu.memory_space<vmem>>, vector<8x105xf32>
    tpu.vector_store %arg8[%c112_79, %c0_80], %108 {strides = array<i32>} : memref<200x105xf32, #tpu.memory_space<vmem>>, vector<8x105xf32>,
    %110 = vector.extract_strided_slice %79 {offsets = [0, 15], sizes = [8, 105], strides = [1, 1]} : vector<8x129xf32> to vector<8x105xf32>
    %c120_81 = arith.constant 120 : index
    %c0_82 = arith.constant 0 : index
    %111 = vector.load %arg8[%c120_81, %c0_82] : memref<200x105xf32, #tpu.memory_space<vmem>>, vector<8x105xf32>
    tpu.vector_store %arg8[%c120_81, %c0_82], %110 {strides = array<i32>} : memref<200x105xf32, #tpu.memory_space<vmem>>, vector<8x105xf32>,
    %112 = vector.extract_strided_slice %79 {offsets = [0, 16], sizes = [8, 105], strides = [1, 1]} : vector<8x129xf32> to vector<8x105xf32>
    %c128_83 = arith.constant 128 : index
    %c0_84 = arith.constant 0 : index
    %113 = vector.load %arg8[%c128_83, %c0_84] : memref<200x105xf32, #tpu.memory_space<vmem>>, vector<8x105xf32>
    tpu.vector_store %arg8[%c128_83, %c0_84], %112 {strides = array<i32>} : memref<200x105xf32, #tpu.memory_space<vmem>>, vector<8x105xf32>,
    %114 = vector.extract_strided_slice %79 {offsets = [0, 17], sizes = [8, 105], strides = [1, 1]} : vector<8x129xf32> to vector<8x105xf32>
    %c136_85 = arith.constant 136 : index
    %c0_86 = arith.constant 0 : index
    %115 = vector.load %arg8[%c136_85, %c0_86] : memref<200x105xf32, #tpu.memory_space<vmem>>, vector<8x105xf32>
    tpu.vector_store %arg8[%c136_85, %c0_86], %114 {strides = array<i32>} : memref<200x105xf32, #tpu.memory_space<vmem>>, vector<8x105xf32>,
    %116 = vector.extract_strided_slice %79 {offsets = [0, 18], sizes = [8, 105], strides = [1, 1]} : vector<8x129xf32> to vector<8x105xf32>
    %c144_87 = arith.constant 144 : index
    %c0_88 = arith.constant 0 : index
    %117 = vector.load %arg8[%c144_87, %c0_88] : memref<200x105xf32, #tpu.memory_space<vmem>>, vector<8x105xf32>
    tpu.vector_store %arg8[%c144_87, %c0_88], %116 {strides = array<i32>} : memref<200x105xf32, #tpu.memory_space<vmem>>, vector<8x105xf32>,
    %118 = vector.extract_strided_slice %79 {offsets = [0, 19], sizes = [8, 105], strides = [1, 1]} : vector<8x129xf32> to vector<8x105xf32>
    %c152_89 = arith.constant 152 : index
    %c0_90 = arith.constant 0 : index
    %119 = vector.load %arg8[%c152_89, %c0_90] : memref<200x105xf32, #tpu.memory_space<vmem>>, vector<8x105xf32>
    tpu.vector_store %arg8[%c152_89, %c0_90], %118 {strides = array<i32>} : memref<200x105xf32, #tpu.memory_space<vmem>>, vector<8x105xf32>,
    %120 = vector.extract_strided_slice %79 {offsets = [0, 20], sizes = [8, 105], strides = [1, 1]} : vector<8x129xf32> to vector<8x105xf32>
    %c160_91 = arith.constant 160 : index
    %c0_92 = arith.constant 0 : index
    %121 = vector.load %arg8[%c160_91, %c0_92] : memref<200x105xf32, #tpu.memory_space<vmem>>, vector<8x105xf32>
    tpu.vector_store %arg8[%c160_91, %c0_92], %120 {strides = array<i32>} : memref<200x105xf32, #tpu.memory_space<vmem>>, vector<8x105xf32>,
    %122 = vector.extract_strided_slice %79 {offsets = [0, 21], sizes = [8, 105], strides = [1, 1]} : vector<8x129xf32> to vector<8x105xf32>
    %c168_93 = arith.constant 168 : index
    %c0_94 = arith.constant 0 : index
    %123 = vector.load %arg8[%c168_93, %c0_94] : memref<200x105xf32, #tpu.memory_space<vmem>>, vector<8x105xf32>
    tpu.vector_store %arg8[%c168_93, %c0_94], %122 {strides = array<i32>} : memref<200x105xf32, #tpu.memory_space<vmem>>, vector<8x105xf32>,
    %124 = vector.extract_strided_slice %79 {offsets = [0, 22], sizes = [8, 105], strides = [1, 1]} : vector<8x129xf32> to vector<8x105xf32>
    %c176_95 = arith.constant 176 : index
    %c0_96 = arith.constant 0 : index
    %125 = vector.load %arg8[%c176_95, %c0_96] : memref<200x105xf32, #tpu.memory_space<vmem>>, vector<8x105xf32>
    tpu.vector_store %arg8[%c176_95, %c0_96], %124 {strides = array<i32>} : memref<200x105xf32, #tpu.memory_space<vmem>>, vector<8x105xf32>,
    %126 = vector.extract_strided_slice %79 {offsets = [0, 23], sizes = [8, 105], strides = [1, 1]} : vector<8x129xf32> to vector<8x105xf32>
    %c184_97 = arith.constant 184 : index
    %c0_98 = arith.constant 0 : index
    %127 = vector.load %arg8[%c184_97, %c0_98] : memref<200x105xf32, #tpu.memory_space<vmem>>, vector<8x105xf32>
    tpu.vector_store %arg8[%c184_97, %c0_98], %126 {strides = array<i32>} : memref<200x105xf32, #tpu.memory_space<vmem>>, vector<8x105xf32>,
    %128 = vector.extract_strided_slice %79 {offsets = [0, 24], sizes = [8, 105], strides = [1, 1]} : vector<8x129xf32> to vector<8x105xf32>
    %c192_99 = arith.constant 192 : index
    %c0_100 = arith.constant 0 : index
    %129 = vector.load %arg8[%c192_99, %c0_100] : memref<200x105xf32, #tpu.memory_space<vmem>>, vector<8x105xf32>
    tpu.vector_store %arg8[%c192_99, %c0_100], %128 {strides = array<i32>} : memref<200x105xf32, #tpu.memory_space<vmem>>, vector<8x105xf32>,
    %c0_101 = arith.constant 0 : index
    %c0_102 = arith.constant 0 : index
    %130 = vector.load %arg2[%c0_101, %c0_102] : memref<128x200xf32, #tpu.memory_space<vmem>>, vector<128x200xf32>
    %c0_103 = arith.constant 0 : index
    %c0_104 = arith.constant 0 : index
    %131 = vector.load %arg8[%c0_103, %c0_104] : memref<200x105xf32, #tpu.memory_space<vmem>>, vector<200x105xf32>
    %cst_105 = arith.constant dense<0.000000e+00> : vector<128x105xf32>
    %132 = tpu.matmul %130, %131, %cst_105 {dimension_numbers = #tpu.dot_dimension_numbers<[1], [0], [0], [1], [0, 0, 1, 1], [], []>} : vector<128x200xf32>, vector<200x105xf32>, vector<128x105xf32> -> vector<128x105xf32>
    %c0_106 = arith.constant 0 : index
    %c0_107 = arith.constant 0 : index
    %133 = vector.load %arg3[%c0_106, %c0_107] : memref<128x1xf32, #tpu.memory_space<vmem>>, vector<128x1xf32>
    %134 = vector.broadcast %133 : vector<128x1xf32> to vector<128x105xf32>
    %135 = arith.addf %132, %134 : vector<128x105xf32>
    %cst_108 = arith.constant 0.000000e+00 : f32
    %136 = vector.broadcast %cst_108 : f32 to vector<128x105xf32>
    %137 = arith.cmpf ogt, %135, %136 : vector<128x105xf32>
    %cst_109 = arith.constant 0.000000e+00 : f32
    %138 = vector.broadcast %cst_109 : f32 to vector<128x105xf32>
    %139 = arith.minimumf %135, %138 : vector<128x105xf32>
    %140 = math.exp %139 : vector<128x105xf32>
    %cst_110 = arith.constant 1.000000e+00 : f32
    %141 = vector.broadcast %cst_110 : f32 to vector<128x105xf32>
    %142 = arith.subf %140, %141 : vector<128x105xf32>
    %143 = arith.select %137, %135, %142 : vector<128x105xi1>, vector<128x105xf32>
    %c0_111 = arith.constant 0 : index
    %c0_112 = arith.constant 0 : index
    %144 = vector.load %arg4[%c0_111, %c0_112] : memref<105x8xf32, #tpu.memory_space<vmem>>, vector<105x8xf32>
    %cst_113 = arith.constant dense<0.000000e+00> : vector<128x8xf32>
    %145 = tpu.matmul %143, %144, %cst_113 {dimension_numbers = #tpu.dot_dimension_numbers<[1], [0], [0], [1], [0, 0, 1, 1], [], []>} : vector<128x105xf32>, vector<105x8xf32>, vector<128x8xf32> -> vector<128x8xf32>
    %cst_114 = arith.constant 0.0133333337 : f32
    %146 = vector.broadcast %cst_114 : f32 to vector<128x8xf32>
    %147 = arith.mulf %145, %146 : vector<128x8xf32>
    %c0_115 = arith.constant 0 : index
    %c0_116 = arith.constant 0 : index
    %148 = vector.load %arg5[%c0_115, %c0_116] : memref<128x128xf32, #tpu.memory_space<vmem>>, vector<128x128xf32>
    %cst_117 = arith.constant dense<0.000000e+00> : vector<128x8xf32>
    %149 = tpu.matmul %148, %147, %cst_117 {dimension_numbers = #tpu.dot_dimension_numbers<[1], [0], [0], [1], [0, 0, 1, 1], [], []>} : vector<128x128xf32>, vector<128x8xf32>, vector<128x8xf32> -> vector<128x8xf32>
    %c0_118 = arith.constant 0 : index
    %c0_119 = arith.constant 0 : index
    %150 = vector.load %arg6[%c0_118, %c0_119] : memref<128x1xf32, #tpu.memory_space<vmem>>, vector<128x1xf32>
    %151 = vector.broadcast %150 : vector<128x1xf32> to vector<128x8xf32>
    %152 = arith.addf %149, %151 : vector<128x8xf32>
    %c1_120 = arith.constant 1 : index
    %c0_121 = arith.constant 0 : index
    %c0_122 = arith.constant 0 : index
    %153 = vector.load %arg7[%c1_120, %c0_121, %c0_122] : memref<2x128x8xf32, #tpu.memory_space<vmem>>, vector<1x128x8xf32>
    %154 = vector.shape_cast %153 : vector<1x128x8xf32> to vector<128x8xf32>
    %155 = vector.shape_cast %152 : vector<128x8xf32> to vector<1x128x8xf32>
    tpu.vector_store %arg7[%c1_120, %c0_121, %c0_122], %155 {strides = array<i32>} : memref<2x128x8xf32, #tpu.memory_space<vmem>>, vector<1x128x8xf32>,
    return
  }
  func.func @transform_0(%arg0: i32) -> (i32, i32, i32) {
    %c0_i32 = arith.constant 0 : i32
    %c0_i32_0 = arith.constant 0 : i32
    %c0_i32_1 = arith.constant 0 : i32
    return %arg0, %c0_i32, %c0_i32_0 : i32, i32, i32
  }
  func.func @transform_1(%arg0: i32) -> (i32, i32) {
    %c0_i32 = arith.constant 0 : i32
    %c0_i32_0 = arith.constant 0 : i32
    %c0_i32_1 = arith.constant 0 : i32
    return %c0_i32, %c0_i32_0 : i32, i32
  }
  func.func @transform_2(%arg0: i32) -> (i32, i32) {
    %c0_i32 = arith.constant 0 : i32
    %c0_i32_0 = arith.constant 0 : i32
    %c0_i32_1 = arith.constant 0 : i32
    return %c0_i32, %c0_i32_0 : i32, i32
  }
  func.func @transform_3(%arg0: i32) -> (i32, i32) {
    %c0_i32 = arith.constant 0 : i32
    %c0_i32_0 = arith.constant 0 : i32
    %c0_i32_1 = arith.constant 0 : i32
    return %c0_i32, %c0_i32_0 : i32, i32
  }
  func.func @transform_4(%arg0: i32) -> (i32, i32) {
    %c0_i32 = arith.constant 0 : i32
    %c0_i32_0 = arith.constant 0 : i32
    %c0_i32_1 = arith.constant 0 : i32
    return %c0_i32, %c0_i32_0 : i32, i32
  }
  func.func @transform_5(%arg0: i32) -> (i32, i32) {
    %c0_i32 = arith.constant 0 : i32
    %c0_i32_0 = arith.constant 0 : i32
    %c0_i32_1 = arith.constant 0 : i32
    return %c0_i32, %c0_i32_0 : i32, i32
  }
  func.func @transform_6(%arg0: i32) -> (i32, i32, i32) {
    %c0_i32 = arith.constant 0 : i32
    %c0_i32_0 = arith.constant 0 : i32
    %c0_i32_1 = arith.constant 0 : i32
    return %arg0, %c0_i32, %c0_i32_0 : i32, i32, i32
  }
}

</mosaic_0001>

<llo_original>
// kernel: tpu_custom_call.1
$region0: #{tpu_custom_call.1}
  #allocation0 [shape = 'u32[]', space=smem, size = 0x4, offset = 0x4, fixed_abs, tag = 'smem constant byte address 0x4 - core index']
  #allocation1 [shape = 'u32[72,128]{1,0:T(1,128)}', space=vmem, size = 0x9000, scoped, tag = 'internal scratch']
  #allocation2 [shape = 'f32[200,105]{1,0:T(8,128)}', space=vmem, size = 0x19000, scoped, tag = 'scratch operand']
  %s0 = inlined_call_operand.vmem [shape: f32[8,8,129], index: 0, kind: input, shape index: {}]
  %s1 = inlined_call_operand.vmem [shape: f32[128,200], index: 1, kind: input, shape index: {}]
  %s2 = inlined_call_operand.vmem [shape: f32[128,1], index: 2, kind: input, shape index: {}]
  %s3 = inlined_call_operand.vmem [shape: f32[105,8], index: 3, kind: input, shape index: {}]
  %s4 = inlined_call_operand.vmem [shape: f32[128,128], index: 4, kind: input, shape index: {}]
  %s5 = inlined_call_operand.vmem [shape: f32[128,1], index: 5, kind: input, shape index: {}]
  %s6 = inlined_call_operand.vmem [shape: f32[8,128,8], index: 6, kind: output, shape index: {}]
  %s7 = sld [smem:[#allocation0]]
  $region57: #{tpu_custom_call.1} parent=0
    _
  %s9 = ssub.s32 1, %s7
  %s10 = scalar_select 0, %s9, %s7
  loop: start=0, step=1, limit=6
  $region2: #{tpu_custom_call.1} parent=0 // loop_pre_header
    _
  $region3: #{tpu_custom_call.1} parent=0 // loop_header
    %s12 = sphi 0, %s16
    %p13 = scmp.ge.s32.totalorder %s12, 6
    %s22 = sphi 0, %s24
    %s25 = sphi 0, %s22
    %s26 = sphi 0, %s25
    %s42 = sphi 0, %s26
    %s46 = sphi 0, %s46
    %s48 = sphi 0, %s46
    %s49 = sphi 0, %s48
    %s63 = sphi 0, %s49
    %s67 = sphi 0, %s67
    %s69 = sphi 0, %s67
    %s70 = sphi 0, %s69
    %s84 = sphi 0, %s70
    %s88 = sphi 0, %s88
    %s90 = sphi 0, %s88
    %s91 = sphi 0, %s90
    %s105 = sphi 0, %s91
    %s109 = sphi 0, %s109
    %s111 = sphi 0, %s109
    %s112 = sphi 0, %s111
    %s126 = sphi 0, %s112
    %s130 = sphi 0, %s130
    %s132 = sphi 0, %s130
    %s133 = sphi 0, %s132
    %s147 = sphi 0, %s133
    %s153 = sphi 0, %s155
    %s156 = sphi 0, %s153
    %s157 = sphi 0, %s156
    %s173 = sphi 0, %s157
  $region4: #{tpu_custom_call.1} parent=0 // loop_header_branch
    %15 = sbr.rel (%p13) target = $region8
  $region5: #{tpu_custom_call.1} parent=0 // loop_body
    %s17 = ssub.s32 %s12, 1
    %s18 = ssub.s32 %s12, 2
    %s19 = sadd.s32 %s12, 1
    %s20 = ssub.s32 %s12, %s19
    %p21 = scmp.eq.s32.totalorder %s20, 0
    %s23 = sadd.s32 %s22, 1
    %s24 = scalar_select %p21, %s22, %s23
    %p27 = pneg %p21
    %p28 = scmp.eq.s32.totalorder %s12, 3
    %p29 = por %p27, %p28
    %p30 = scmp.ne.s32.totalorder %s22, %s25
    %p31 = scmp.eq.s32.totalorder %s12, 0
    %p32 = por %p30, %p31
    %p33 = scmp.ne.s32.totalorder %s22, %s25
    %p34 = scmp.eq.s32.totalorder %s17, 3
    %p35 = por %p33, %p34
    %p36 = scmp.ne.s32.totalorder %s25, %s26
    %p37 = scmp.eq.s32.totalorder %s17, 0
    %p38 = por %p36, %p37
    %p39 = scmp.ne.s32.totalorder %s25, %s26
    %p40 = scmp.eq.s32.totalorder %s18, 3
    %p41 = por %p39, %p40
    %p43 = scmp.ne.s32.totalorder %s26, %s42
    %p44 = scmp.eq.s32.totalorder %s18, 0
    %p45 = por %p43, %p44
    %s47 = sadd.s32 %s46, 1
    %p50 = scmp.eq.s32.totalorder %s12, 3
    %p51 = scmp.ne.s32.totalorder %s46, %s48
    %p52 = scmp.eq.s32.totalorder %s12, 0
    %p53 = por %p51, %p52
    %p54 = scmp.ne.s32.totalorder %s46, %s48
    %p55 = scmp.eq.s32.totalorder %s17, 3
    %p56 = por %p54, %p55
    %p57 = scmp.ne.s32.totalorder %s48, %s49
    %p58 = scmp.eq.s32.totalorder %s17, 0
    %p59 = por %p57, %p58
    %p60 = scmp.ne.s32.totalorder %s48, %s49
    %p61 = scmp.eq.s32.totalorder %s18, 3
    %p62 = por %p60, %p61
    %p64 = scmp.ne.s32.totalorder %s49, %s63
    %p65 = scmp.eq.s32.totalorder %s18, 0
    %p66 = por %p64, %p65
    %s68 = sadd.s32 %s67, 1
    %p71 = scmp.eq.s32.totalorder %s12, 3
    %p72 = scmp.ne.s32.totalorder %s67, %s69
    %p73 = scmp.eq.s32.totalorder %s12, 0
    %p74 = por %p72, %p73
    %p75 = scmp.ne.s32.totalorder %s67, %s69
    %p76 = scmp.eq.s32.totalorder %s17, 3
    %p77 = por %p75, %p76
    %p78 = scmp.ne.s32.totalorder %s69, %s70
    %p79 = scmp.eq.s32.totalorder %s17, 0
    %p80 = por %p78, %p79
    %p81 = scmp.ne.s32.totalorder %s69, %s70
    %p82 = scmp.eq.s32.totalorder %s18, 3
    %p83 = por %p81, %p82
    %p85 = scmp.ne.s32.totalorder %s70, %s84
    %p86 = scmp.eq.s32.totalorder %s18, 0
    %p87 = por %p85, %p86
    %s89 = sadd.s32 %s88, 1
    %p92 = scmp.eq.s32.totalorder %s12, 3
    %p93 = scmp.ne.s32.totalorder %s88, %s90
    %p94 = scmp.eq.s32.totalorder %s12, 0
    %p95 = por %p93, %p94
    %p96 = scmp.ne.s32.totalorder %s88, %s90
    %p97 = scmp.eq.s32.totalorder %s17, 3
    %p98 = por %p96, %p97
    %p99 = scmp.ne.s32.totalorder %s90, %s91
    %p100 = scmp.eq.s32.totalorder %s17, 0
    %p101 = por %p99, %p100
    %p102 = scmp.ne.s32.totalorder %s90, %s91
    %p103 = scmp.eq.s32.totalorder %s18, 3
    %p104 = por %p102, %p103
    %p106 = scmp.ne.s32.totalorder %s91, %s105
    %p107 = scmp.eq.s32.totalorder %s18, 0
    %p108 = por %p106, %p107
    %s110 = sadd.s32 %s109, 1
    %p113 = scmp.eq.s32.totalorder %s12, 3
    %p114 = scmp.ne.s32.totalorder %s109, %s111
    %p115 = scmp.eq.s32.totalorder %s12, 0
    %p116 = por %p114, %p115
    %p117 = scmp.ne.s32.totalorder %s109, %s111
    %p118 = scmp.eq.s32.totalorder %s17, 3
    %p119 = por %p117, %p118
    %p120 = scmp.ne.s32.totalorder %s111, %s112
    %p121 = scmp.eq.s32.totalorder %s17, 0
    %p122 = por %p120, %p121
    %p123 = scmp.ne.s32.totalorder %s111, %s112
    %p124 = scmp.eq.s32.totalorder %s18, 3
    %p125 = por %p123, %p124
    %p127 = scmp.ne.s32.totalorder %s112, %s126
    %p128 = scmp.eq.s32.totalorder %s18, 0
    %p129 = por %p127, %p128
    %s131 = sadd.s32 %s130, 1
    %p134 = scmp.eq.s32.totalorder %s12, 3
    %p135 = scmp.ne.s32.totalorder %s130, %s132
    %p136 = scmp.eq.s32.totalorder %s12, 0
    %p137 = por %p135, %p136
    %p138 = scmp.ne.s32.totalorder %s130, %s132
    %p139 = scmp.eq.s32.totalorder %s17, 3
    %p140 = por %p138, %p139
    %p141 = scmp.ne.s32.totalorder %s132, %s133
    %p142 = scmp.eq.s32.totalorder %s17, 0
    %p143 = por %p141, %p142
    %p144 = scmp.ne.s32.totalorder %s132, %s133
    %p145 = scmp.eq.s32.totalorder %s18, 3
    %p146 = por %p144, %p145
    %p148 = scmp.ne.s32.totalorder %s133, %s147
    %p149 = scmp.eq.s32.totalorder %s18, 0
    %p150 = por %p148, %p149
    %s151 = ssub.s32 %s12, %s19
    %p152 = scmp.eq.s32.totalorder %s151, 0
    %s154 = sadd.s32 %s153, 1
    %s155 = scalar_select %p152, %s153, %s154
    %p158 = pneg %p152
    %p159 = scmp.eq.s32.totalorder %s12, 3
    %p160 = por %p158, %p159
    %p161 = scmp.ne.s32.totalorder %s153, %s156
    %p162 = scmp.eq.s32.totalorder %s12, 0
    %p163 = por %p161, %p162
    %p164 = scmp.ne.s32.totalorder %s153, %s156
    %p165 = scmp.eq.s32.totalorder %s17, 3
    %p166 = por %p164, %p165
    %p167 = scmp.ne.s32.totalorder %s156, %s157
    %p168 = scmp.eq.s32.totalorder %s17, 0
    %p169 = por %p167, %p168
    %p170 = scmp.ne.s32.totalorder %s156, %s157
    %p171 = scmp.eq.s32.totalorder %s18, 3
    %p172 = por %p170, %p171
    %p174 = scmp.ne.s32.totalorder %s157, %s173
    %p175 = scmp.eq.s32.totalorder %s18, 0
    %p176 = por %p174, %p175
    %p177 = scmp.le.s32.totalorder 1, %s12
    %p178 = scmp.lt.s32.totalorder %s12, 5
    %p179 = pnand %p177, %p178
    %p180 = pneg %p179
    // Predicated region
    $region9: #{tpu_custom_call.1} parent=5 // pred_check
      _
    $region10: #{tpu_custom_call.1} parent=5 // pred_check_branch
      %182 = sbr.rel (%p179) target = $region12
    $region11: #{tpu_custom_call.1} parent=5 // pred_region
      %s183 = ssub.s32 %s12, 1
      // Predicated region
      $region13: #{tpu_custom_call.1} parent=11 // pred_check
        %p184 = pneg %p59
      $region14: #{tpu_custom_call.1} parent=11 // pred_check_branch
        %186 = sbr.rel (%p184) target = $region16
      $region15: #{tpu_custom_call.1} parent=11 // pred_region
        _
      $region16: #{tpu_custom_call.1} parent=11 // pred_fallthru
        _
      // Predicated region
      $region17: #{tpu_custom_call.1} parent=11 // pred_check
        %p187 = pneg %p80
      $region18: #{tpu_custom_call.1} parent=11 // pred_check_branch
        %189 = sbr.rel (%p187) target = $region20
      $region19: #{tpu_custom_call.1} parent=11 // pred_region
        _
      $region20: #{tpu_custom_call.1} parent=11 // pred_fallthru
        _
      // Predicated region
      $region21: #{tpu_custom_call.1} parent=11 // pred_check
        %p190 = pneg %p101
      $region22: #{tpu_custom_call.1} parent=11 // pred_check_branch
        %192 = sbr.rel (%p190) target = $region24
      $region23: #{tpu_custom_call.1} parent=11 // pred_region
        _
      $region24: #{tpu_custom_call.1} parent=11 // pred_fallthru
        _
      // Predicated region
      $region25: #{tpu_custom_call.1} parent=11 // pred_check
        %p193 = pneg %p122
      $region26: #{tpu_custom_call.1} parent=11 // pred_check_branch
        %195 = sbr.rel (%p193) target = $region28
      $region27: #{tpu_custom_call.1} parent=11 // pred_region
        _
      $region28: #{tpu_custom_call.1} parent=11 // pred_fallthru
        _
      // Predicated region
      $region29: #{tpu_custom_call.1} parent=11 // pred_check
        %p196 = pneg %p143
      $region30: #{tpu_custom_call.1} parent=11 // pred_check_branch
        %198 = sbr.rel (%p196) target = $region32
      $region31: #{tpu_custom_call.1} parent=11 // pred_region
        _
      $region32: #{tpu_custom_call.1} parent=11 // pred_fallthru
        _
    $region12: #{tpu_custom_call.1} parent=5 // pred_fallthru
      _
    %p199 = scmp.lt.s32.totalorder %s12, 4
    // Predicated region
    $region33: #{tpu_custom_call.1} parent=5 // pred_check
      %p200 = pneg %p199
    $region34: #{tpu_custom_call.1} parent=5 // pred_check_branch
      %202 = sbr.rel (%p200) target = $region36
    $region35: #{tpu_custom_call.1} parent=5 // pred_region
      // Predicated region
      $region37: #{tpu_custom_call.1} parent=35 // pred_check
        %p203 = pneg %p32
      $region38: #{tpu_custom_call.1} parent=35 // pred_check_branch
        %205 = sbr.rel (%p203) target = $region40
      $region39: #{tpu_custom_call.1} parent=35 // pred_region
        %s206 = smul.u32 2, %s12
        %p207 = scmp.lt.s32.totalorder %s206, 7
        %s208 = scalar_select %p207, %s206, 7
        %s209 = smul.addr %s208, 2
        %s210 = smul.addr %s209, 8
        %s211 = scalar_lea.vmem %s0, %s210
        %s212 = smul.u32 2, %s12
      $region40: #{tpu_custom_call.1} parent=35 // pred_fallthru
        _
    $region36: #{tpu_custom_call.1} parent=5 // pred_fallthru
      _
    %p213 = scmp.le.s32.totalorder 1, %s12
    %p214 = scmp.lt.s32.totalorder %s12, 5
    %p215 = pnand %p213, %p214
    %p216 = pneg %p215
    // Predicated region
    $region41: #{tpu_custom_call.1} parent=5 // pred_check
      _
    $region42: #{tpu_custom_call.1} parent=5 // pred_check_branch
      %218 = sbr.rel (%p215) target = $region44
    $region43: #{tpu_custom_call.1} parent=5 // pred_region
      %s219 = ssub.s32 %s12, 1
      %s220 = smul.u32 2, %s17
      %p221 = scmp.lt.s32.totalorder %s220, 7
      %s222 = scalar_select %p221, %s220, 7
      %s223 = smul.addr %s222, 2
      %s224 = smul.addr %s223, 8
      %s225 = scalar_lea.vmem %s0, %s224
      %p226 = pneg %p38
      %p227 = pneg %p35
      %p228 = pneg %p59
      %p229 = pneg %p56
      %p230 = pneg %p80
      %p231 = pneg %p77
      %p232 = pneg %p101
      %p233 = pneg %p98
      %p234 = pneg %p122
      %p235 = pneg %p119
      %p236 = pneg %p143
      %p237 = pneg %p140
      %p238 = pneg %p169
      %p239 = pneg %p166
      %s240 = smul.u32 2, %s17
      %p241 = scmp.lt.s32.totalorder %s240, 7
      %s242 = scalar_select %p241, %s240, 7
      %s243 = smul.addr %s242, 16
      %s244 = smul.addr %s243, 8
      %s245 = scalar_lea.vmem %s6, %s244
      %s246 = smul.u32 2, %s17
      %p247 = scmp.lt.s32.totalorder %s246, 7
      %s248 = scalar_select %p247, %s246, 7
      %s249 = smul.addr %s248, 2
      %s250 = smul.addr %s249, 8
      %s251 = scalar_lea.vmem %s0, %s250
      %s252 = smul.u32 2, %s17
      %s253 = smul.u32 2, %s17
      %p254 = scmp.lt.s32.totalorder %s253, 7
      %s255 = scalar_select %p254, %s253, 7
      %s256 = smul.addr %s255, 16
      %s257 = smul.addr %s256, 8
      %s258 = scalar_lea.vmem %s6, %s257
      %s259 = smul.u32 2, %s17
      %v260 = vld [vmem:[%s251] sm:$0xff]
      %v261 = vld [vmem:[%s251 + $0x8] sm:$0xff]
      %vm262 = vcmask 859136
      %263 = vst.msk [vmem:[#allocation2] sm:$0xff] %vm262, %v260
      %265 = vrot.lane.b32.xlu0 %v260, 127
      %v266 = vpop.permute.xlu0 %265
      %268 = vst.msk [vmem:[#allocation2 + $0x8] sm:$0xff] %vm262, %v266
      %269 = vrot.lane.b32.xlu0 %v260, 126
      %v270 = vpop.permute.xlu0 %269
      %272 = vst.msk [vmem:[#allocation2 + $0x10] sm:$0xff] %vm262, %v270
      %273 = vrot.lane.b32.xlu0 %v260, 125
      %v274 = vpop.permute.xlu0 %273
      %276 = vst.msk [vmem:[#allocation2 + $0x18] sm:$0xff] %vm262, %v274
      %277 = vrot.lane.b32.xlu0 %v260, 124
      %v278 = vpop.permute.xlu0 %277
      %280 = vst.msk [vmem:[#allocation2 + $0x20] sm:$0xff] %vm262, %v278
      %281 = vrot.lane.b32.xlu0 %v260, 123
      %v282 = vpop.permute.xlu0 %281
      %284 = vst.msk [vmem:[#allocation2 + $0x28] sm:$0xff] %vm262, %v282
      %285 = vrot.lane.b32.xlu0 %v260, 122
      %v286 = vpop.permute.xlu0 %285
      %288 = vst.msk [vmem:[#allocation2 + $0x30] sm:$0xff] %vm262, %v286
      %289 = vrot.lane.b32.xlu0 %v260, 121
      %v290 = vpop.permute.xlu0 %289
      %292 = vst.msk [vmem:[#allocation2 + $0x38] sm:$0xff] %vm262, %v290
      %293 = vrot.lane.b32.xlu0 %v260, 120
      %v294 = vpop.permute.xlu0 %293
      %296 = vst.msk [vmem:[#allocation2 + $0x40] sm:$0xff] %vm262, %v294
      %297 = vrot.lane.b32.xlu0 %v260, 119
      %v298 = vpop.permute.xlu0 %297
      %300 = vst.msk [vmem:[#allocation2 + $0x48] sm:$0xff] %vm262, %v298
      %301 = vrot.lane.b32.xlu0 %v260, 118
      %v302 = vpop.permute.xlu0 %301
      %304 = vst.msk [vmem:[#allocation2 + $0x50] sm:$0xff] %vm262, %v302
      %305 = vrot.lane.b32.xlu0 %v260, 117
      %v306 = vpop.permute.xlu0 %305
      %308 = vst.msk [vmem:[#allocation2 + $0x58] sm:$0xff] %vm262, %v306
      %309 = vrot.lane.b32.xlu0 %v260, 116
      %v310 = vpop.permute.xlu0 %309
      %312 = vst.msk [vmem:[#allocation2 + $0x60] sm:$0xff] %vm262, %v310
      %313 = vrot.lane.b32.xlu0 %v260, 115
      %v314 = vpop.permute.xlu0 %313
      %316 = vst.msk [vmem:[#allocation2 + $0x68] sm:$0xff] %vm262, %v314
      %317 = vrot.lane.b32.xlu0 %v260, 114
      %v318 = vpop.permute.xlu0 %317
      %320 = vst.msk [vmem:[#allocation2 + $0x70] sm:$0xff] %vm262, %v318
      %321 = vrot.lane.b32.xlu0 %v260, 113
      %v322 = vpop.permute.xlu0 %321
      %324 = vst.msk [vmem:[#allocation2 + $0x78] sm:$0xff] %vm262, %v322
      %325 = vrot.lane.b32.xlu0 %v260, 112
      %v326 = vpop.permute.xlu0 %325
      %328 = vst.msk [vmem:[#allocation2 + $0x80] sm:$0xff] %vm262, %v326
      %329 = vrot.lane.b32.xlu0 %v260, 111
      %v330 = vpop.permute.xlu0 %329
      %332 = vst.msk [vmem:[#allocation2 + $0x88] sm:$0xff] %vm262, %v330
      %333 = vrot.lane.b32.xlu0 %v260, 110
      %v334 = vpop.permute.xlu0 %333
      %336 = vst.msk [vmem:[#allocation2 + $0x90] sm:$0xff] %vm262, %v334
      %337 = vrot.lane.b32.xlu0 %v260, 109
      %v338 = vpop.permute.xlu0 %337
      %340 = vst.msk [vmem:[#allocation2 + $0x98] sm:$0xff] %vm262, %v338
      %341 = vrot.lane.b32.xlu0 %v260, 108
      %v342 = vpop.permute.xlu0 %341
      %344 = vst.msk [vmem:[#allocation2 + $0xa0] sm:$0xff] %vm262, %v342
      %345 = vrot.lane.b32.xlu0 %v260, 107
      %v346 = vpop.permute.xlu0 %345
      %348 = vst.msk [vmem:[#allocation2 + $0xa8] sm:$0xff] %vm262, %v346
      %349 = vrot.lane.b32.xlu0 %v260, 106
      %v350 = vpop.permute.xlu0 %349
      %352 = vst.msk [vmem:[#allocation2 + $0xb0] sm:$0xff] %vm262, %v350
      %353 = vrot.lane.b32.xlu0 %v260, 105
      %v354 = vpop.permute.xlu0 %353
      %356 = vst.msk [vmem:[#allocation2 + $0xb8] sm:$0xff] %vm262, %v354
      %358 = vrot.lane.b32.xlu0 %v260, 104
      %v359 = vpop.permute.xlu0 %358
      %360 = vrot.lane.b32.xlu0 %v261, 104
      %v361 = vpop.permute.xlu0 %360
      %vm362 = vcmask 850944
      %v363 = vsel %vm362, %v359, %v361
      %365 = vst.msk [vmem:[#allocation2 + $0xc0] sm:$0xff] %vm262, %v363
      %v366 = vld [vmem:[%s1] sm:$0xff]
      %v367 = vld [vmem:[%s1 + $0x8] sm:$0xff]
      %v368 = vld [vmem:[%s1 + $0x10] sm:$0xff]
      %v369 = vld [vmem:[%s1 + $0x18] sm:$0xff]
      %v370 = vld [vmem:[%s1 + $0x20] sm:$0xff]
      %v371 = vld [vmem:[%s1 + $0x28] sm:$0xff]
      %v372 = vld [vmem:[%s1 + $0x30] sm:$0xff]
      %v373 = vld [vmem:[%s1 + $0x38] sm:$0xff]
      %v374 = vld [vmem:[%s1 + $0x40] sm:$0xff]
      %v375 = vld [vmem:[%s1 + $0x48] sm:$0xff]
      %v376 = vld [vmem:[%s1 + $0x50] sm:$0xff]
      %v377 = vld [vmem:[%s1 + $0x58] sm:$0xff]
      %v378 = vld [vmem:[%s1 + $0x60] sm:$0xff]
      %v379 = vld [vmem:[%s1 + $0x68] sm:$0xff]
      %v380 = vld [vmem:[%s1 + $0x70] sm:$0xff]
      %v381 = vld [vmem:[%s1 + $0x78] sm:$0xff]
      %v382 = vld [vmem:[%s1 + $0x80] sm:$0xff]
      %v383 = vld [vmem:[%s1 + $0x88] sm:$0xff]
      %v384 = vld [vmem:[%s1 + $0x90] sm:$0xff]
      %v385 = vld [vmem:[%s1 + $0x98] sm:$0xff]
      %v386 = vld [vmem:[%s1 + $0xa0] sm:$0xff]
      %v387 = vld [vmem:[%s1 + $0xa8] sm:$0xff]
      %v388 = vld [vmem:[%s1 + $0xb0] sm:$0xff]
      %v389 = vld [vmem:[%s1 + $0xb8] sm:$0xff]
      %v390 = vld [vmem:[%s1 + $0xc0] sm:$0xff]
      %v391 = vld [vmem:[%s1 + $0xc8] sm:$0xff]
      %v392 = vld [vmem:[%s1 + $0xd0] sm:$0xff]
      %v393 = vld [vmem:[%s1 + $0xd8] sm:$0xff]
      %v394 = vld [vmem:[%s1 + $0xe0] sm:$0xff]
      %v395 = vld [vmem:[%s1 + $0xe8] sm:$0xff]
      %v396 = vld [vmem:[%s1 + $0xf0] sm:$0xff]
      %v397 = vld [vmem:[%s1 + $0xf8] sm:$0xff]
      %v398 = vld [vmem:[#allocation2] sm:$0xff]
      %v399 = vld [vmem:[#allocation2 + $0x8] sm:$0xff]
      %v400 = vld [vmem:[#allocation2 + $0x10] sm:$0xff]
      %v401 = vld [vmem:[#allocation2 + $0x18] sm:$0xff]
      %v402 = vld [vmem:[#allocation2 + $0x20] sm:$0xff]
      %v403 = vld [vmem:[#allocation2 + $0x28] sm:$0xff]
      %v404 = vld [vmem:[#allocation2 + $0x30] sm:$0xff]
      %v405 = vld [vmem:[#allocation2 + $0x38] sm:$0xff]
      %v406 = vld [vmem:[#allocation2 + $0x40] sm:$0xff]
      %v407 = vld [vmem:[#allocation2 + $0x48] sm:$0xff]
      %v408 = vld [vmem:[#allocation2 + $0x50] sm:$0xff]
      %v409 = vld [vmem:[#allocation2 + $0x58] sm:$0xff]
      %v410 = vld [vmem:[#allocation2 + $0x60] sm:$0xff]
      %v411 = vld [vmem:[#allocation2 + $0x68] sm:$0xff]
      %v412 = vld [vmem:[#allocation2 + $0x70] sm:$0xff]
      %v413 = vld [vmem:[#allocation2 + $0x78] sm:$0xff]
      %v414 = vld [vmem:[#allocation2 + $0x80] sm:$0xff]
      %v415 = vld [vmem:[#allocation2 + $0x88] sm:$0xff]
      %v416 = vld [vmem:[#allocation2 + $0x90] sm:$0xff]
      %v417 = vld [vmem:[#allocation2 + $0x98] sm:$0xff]
      %v418 = vld [vmem:[#allocation2 + $0xa0] sm:$0xff]
      %v419 = vld [vmem:[#allocation2 + $0xa8] sm:$0xff]
      %v420 = vld [vmem:[#allocation2 + $0xb0] sm:$0xff]
      %v421 = vld [vmem:[#allocation2 + $0xb8] sm:$0xff]
      %v422 = vld [vmem:[#allocation2 + $0xc0] sm:$0xff]
      %v423 = vld [vmem:[%s2] sm:$0xff]
      %v424 = vld [vmem:[%s2 + $0x8] sm:$0xff]
      %v425 = vld [vmem:[%s2 + $0x10] sm:$0xff]
      %v426 = vld [vmem:[%s2 + $0x18] sm:$0xff]
      %v427 = vld [vmem:[%s2 + $0x20] sm:$0xff]
      %v428 = vld [vmem:[%s2 + $0x28] sm:$0xff]
      %v429 = vld [vmem:[%s2 + $0x30] sm:$0xff]
      %v430 = vld [vmem:[%s2 + $0x38] sm:$0xff]
      %v431 = vld [vmem:[%s2 + $0x40] sm:$0xff]
      %v432 = vld [vmem:[%s2 + $0x48] sm:$0xff]
      %v433 = vld [vmem:[%s2 + $0x50] sm:$0xff]
      %v434 = vld [vmem:[%s2 + $0x58] sm:$0xff]
      %v435 = vld [vmem:[%s2 + $0x60] sm:$0xff]
      %v436 = vld [vmem:[%s2 + $0x68] sm:$0xff]
      %v437 = vld [vmem:[%s2 + $0x70] sm:$0xff]
      %v438 = vld [vmem:[%s2 + $0x78] sm:$0xff]
      %440 = vset.pattern.permute.xlu0 0
      %441 = vperm.xlu0 %440, %v423
      %v442 = vpop.permute.xlu0 %441
      %445 = vset.pattern.permute.xlu0 0
      %446 = vperm.xlu0 %445, %v424
      %v447 = vpop.permute.xlu0 %446
      %450 = vset.pattern.permute.xlu0 0
      %451 = vperm.xlu0 %450, %v425
      %v452 = vpop.permute.xlu0 %451
      %455 = vset.pattern.permute.xlu0 0
      %456 = vperm.xlu0 %455, %v426
      %v457 = vpop.permute.xlu0 %456
      %460 = vset.pattern.permute.xlu0 0
      %461 = vperm.xlu0 %460, %v427
      %v462 = vpop.permute.xlu0 %461
      %465 = vset.pattern.permute.xlu0 0
      %466 = vperm.xlu0 %465, %v428
      %v467 = vpop.permute.xlu0 %466
      %470 = vset.pattern.permute.xlu0 0
      %471 = vperm.xlu0 %470, %v429
      %v472 = vpop.permute.xlu0 %471
      %475 = vset.pattern.permute.xlu0 0
      %476 = vperm.xlu0 %475, %v430
      %v477 = vpop.permute.xlu0 %476
      %480 = vset.pattern.permute.xlu0 0
      %481 = vperm.xlu0 %480, %v431
      %v482 = vpop.permute.xlu0 %481
      %485 = vset.pattern.permute.xlu0 0
      %486 = vperm.xlu0 %485, %v432
      %v487 = vpop.permute.xlu0 %486
      %490 = vset.pattern.permute.xlu0 0
      %491 = vperm.xlu0 %490, %v433
      %v492 = vpop.permute.xlu0 %491
      %495 = vset.pattern.permute.xlu0 0
      %496 = vperm.xlu0 %495, %v434
      %v497 = vpop.permute.xlu0 %496
      %500 = vset.pattern.permute.xlu0 0
      %501 = vperm.xlu0 %500, %v435
      %v502 = vpop.permute.xlu0 %501
      %505 = vset.pattern.permute.xlu0 0
      %506 = vperm.xlu0 %505, %v436
      %v507 = vpop.permute.xlu0 %506
      %510 = vset.pattern.permute.xlu0 0
      %511 = vperm.xlu0 %510, %v437
      %v512 = vpop.permute.xlu0 %511
      %515 = vset.pattern.permute.xlu0 0
      %516 = vperm.xlu0 %515, %v438
      %v517 = vpop.permute.xlu0 %516
      %vm519 = vcmask 588800
      %v521 = vsel %vm519, %v367, 0
      %v524 = vsel %vm519, %v369, 0
      %v527 = vsel %vm519, %v371, 0
      %v530 = vsel %vm519, %v373, 0
      %v533 = vsel %vm519, %v375, 0
      %v536 = vsel %vm519, %v377, 0
      %v539 = vsel %vm519, %v379, 0
      %v542 = vsel %vm519, %v381, 0
      %v545 = vsel %vm519, %v383, 0
      %v548 = vsel %vm519, %v385, 0
      %v551 = vsel %vm519, %v387, 0
      %v554 = vsel %vm519, %v389, 0
      %v557 = vsel %vm519, %v391, 0
      %v560 = vsel %vm519, %v393, 0
      %v563 = vsel %vm519, %v395, 0
      %v566 = vsel %vm519, %v397, 0
      %568 = vmatpush.msra.mxu0 %v413
      %569 = vmatpush.msra.mxu0 %v412
      %570 = vmatpush.msra.mxu0 %v411
      %571 = vmatpush.msra.mxu0 %v410
      %572 = vmatpush.msra.mxu0 %v409
      %573 = vmatpush.msra.mxu0 %v408
      %574 = vmatpush.msra.mxu0 %v407
      %575 = vmatpush.msra.mxu0 %v406
      %576 = vmatpush.msra.mxu0 %v405
      %577 = vmatpush.msra.mxu0 %v404
      %578 = vmatpush.msra.mxu0 %v403
      %579 = vmatpush.msra.mxu0 %v402
      %580 = vmatpush.msra.mxu0 %v401
      %581 = vmatpush.msra.mxu0 %v400
      %582 = vmatpush.msra.mxu0 %v399
      %583 = vmatpush.msra.mxu0 %v398
      %584 = vmatmul.f32.gmra.mxu0 %v366
      %v585 = vpop.f32.mrf.mxu0
      %v586 = vadd.f32 %v442, %v585
      %587 = vmatmul.f32.gmra.mxu0 %v368
      %v588 = vpop.f32.mrf.mxu0
      %v589 = vadd.f32 %v447, %v588
      %590 = vmatmul.f32.gmra.mxu0 %v370
      %v591 = vpop.f32.mrf.mxu0
      %v592 = vadd.f32 %v452, %v591
      %593 = vmatmul.f32.gmra.mxu0 %v372
      %v594 = vpop.f32.mrf.mxu0
      %v595 = vadd.f32 %v457, %v594
      %596 = vmatmul.f32.gmra.mxu0 %v374
      %v597 = vpop.f32.mrf.mxu0
      %v598 = vadd.f32 %v462, %v597
      %599 = vmatmul.f32.gmra.mxu0 %v376
      %v600 = vpop.f32.mrf.mxu0
      %v601 = vadd.f32 %v467, %v600
      %602 = vmatmul.f32.gmra.mxu0 %v378
      %v603 = vpop.f32.mrf.mxu0
      %v604 = vadd.f32 %v472, %v603
      %605 = vmatmul.f32.gmra.mxu0 %v380
      %v606 = vpop.f32.mrf.mxu0
      %v607 = vadd.f32 %v477, %v606
      %608 = vmatmul.f32.gmra.mxu0 %v382
      %v609 = vpop.f32.mrf.mxu0
      %v610 = vadd.f32 %v482, %v609
      %611 = vmatmul.f32.gmra.mxu0 %v384
      %v612 = vpop.f32.mrf.mxu0
      %v613 = vadd.f32 %v487, %v612
      %614 = vmatmul.f32.gmra.mxu0 %v386
      %v615 = vpop.f32.mrf.mxu0
      %v616 = vadd.f32 %v492, %v615
      %617 = vmatmul.f32.gmra.mxu0 %v388
      %v618 = vpop.f32.mrf.mxu0
      %v619 = vadd.f32 %v497, %v618
      %620 = vmatmul.f32.gmra.mxu0 %v390
      %v621 = vpop.f32.mrf.mxu0
      %v622 = vadd.f32 %v502, %v621
      %623 = vmatmul.f32.gmra.mxu0 %v392
      %v624 = vpop.f32.mrf.mxu0
      %v625 = vadd.f32 %v507, %v624
      %626 = vmatmul.f32.gmra.mxu0 %v394
      %v627 = vpop.f32.mrf.mxu0
      %v628 = vadd.f32 %v512, %v627
      %629 = vmatmul.f32.gmra.mxu0 %v396
      %v630 = vpop.f32.mrf.mxu0
      %v631 = vadd.f32 %v517, %v630
      %632 = vdwg.mxu0
      %633 = vmatpush.msra.mxu0 0.0
      %634 = vmatpush.msra.mxu0 0.0
      %635 = vmatpush.msra.mxu0 0.0
      %636 = vmatpush.msra.mxu0 0.0
      %637 = vmatpush.msra.mxu0 0.0
      %638 = vmatpush.msra.mxu0 0.0
      %639 = vmatpush.msra.mxu0 0.0
      %640 = vmatpush.msra.mxu0 %v422
      %641 = vmatpush.msra.mxu0 %v421
      %642 = vmatpush.msra.mxu0 %v420
      %643 = vmatpush.msra.mxu0 %v419
      %644 = vmatpush.msra.mxu0 %v418
      %645 = vmatpush.msra.mxu0 %v417
      %646 = vmatpush.msra.mxu0 %v416
      %647 = vmatpush.msra.mxu0 %v415
      %648 = vmatpush.msra.mxu0 %v414
      %649 = vmatmul.f32.gmra.mxu0 %v521
      %v650 = vpop.f32.mrf.mxu0
      %v651 = vadd.f32 %v586, %v650
      %652 = vmatmul.f32.gmra.mxu0 %v524
      %v653 = vpop.f32.mrf.mxu0
      %v654 = vadd.f32 %v589, %v653
      %655 = vmatmul.f32.gmra.mxu0 %v527
      %v656 = vpop.f32.mrf.mxu0
      %v657 = vadd.f32 %v592, %v656
      %658 = vmatmul.f32.gmra.mxu0 %v530
      %v659 = vpop.f32.mrf.mxu0
      %v660 = vadd.f32 %v595, %v659
      %661 = vmatmul.f32.gmra.mxu0 %v533
      %v662 = vpop.f32.mrf.mxu0
      %v663 = vadd.f32 %v598, %v662
      %664 = vmatmul.f32.gmra.mxu0 %v536
      %v665 = vpop.f32.mrf.mxu0
      %v666 = vadd.f32 %v601, %v665
      %667 = vmatmul.f32.gmra.mxu0 %v539
      %v668 = vpop.f32.mrf.mxu0
      %v669 = vadd.f32 %v604, %v668
      %670 = vmatmul.f32.gmra.mxu0 %v542
      %v671 = vpop.f32.mrf.mxu0
      %v672 = vadd.f32 %v607, %v671
      %673 = vmatmul.f32.gmra.mxu0 %v545
      %v674 = vpop.f32.mrf.mxu0
      %v675 = vadd.f32 %v610, %v674
      %676 = vmatmul.f32.gmra.mxu0 %v548
      %v677 = vpop.f32.mrf.mxu0
      %v678 = vadd.f32 %v613, %v677
      %679 = vmatmul.f32.gmra.mxu0 %v551
      %v680 = vpop.f32.mrf.mxu0
      %v681 = vadd.f32 %v616, %v680
      %682 = vmatmul.f32.gmra.mxu0 %v554
      %v683 = vpop.f32.mrf.mxu0
      %v684 = vadd.f32 %v619, %v683
      %685 = vmatmul.f32.gmra.mxu0 %v557
      %v686 = vpop.f32.mrf.mxu0
      %v687 = vadd.f32 %v622, %v686
      %688 = vmatmul.f32.gmra.mxu0 %v560
      %v689 = vpop.f32.mrf.mxu0
      %v690 = vadd.f32 %v625, %v689
      %691 = vmatmul.f32.gmra.mxu0 %v563
      %v692 = vpop.f32.mrf.mxu0
      %v693 = vadd.f32 %v628, %v692
      %694 = vmatmul.f32.gmra.mxu0 %v566
      %v695 = vpop.f32.mrf.mxu0
      %v696 = vadd.f32 %v631, %v695
      %697 = vdwg.mxu0
      %vm698 = vcmp.gt.f32.partialorder %v651, 0.0
      %vm699 = vcmp.gt.f32.partialorder %v654, 0.0
      %vm700 = vcmp.gt.f32.partialorder %v657, 0.0
      %vm701 = vcmp.gt.f32.partialorder %v660, 0.0
      %vm702 = vcmp.gt.f32.partialorder %v663, 0.0
      %vm703 = vcmp.gt.f32.partialorder %v666, 0.0
      %vm704 = vcmp.gt.f32.partialorder %v669, 0.0
      %vm705 = vcmp.gt.f32.partialorder %v672, 0.0
      %vm706 = vcmp.gt.f32.partialorder %v675, 0.0
      %vm707 = vcmp.gt.f32.partialorder %v678, 0.0
      %vm708 = vcmp.gt.f32.partialorder %v681, 0.0
      %vm709 = vcmp.gt.f32.partialorder %v684, 0.0
      %vm710 = vcmp.gt.f32.partialorder %v687, 0.0
      %vm711 = vcmp.gt.f32.partialorder %v690, 0.0
      %vm712 = vcmp.gt.f32.partialorder %v693, 0.0
      %vm713 = vcmp.gt.f32.partialorder %v696, 0.0
      %v714 = vmin.f32 %v651, 0.0
      %v715 = vmin.f32 %v654, 0.0
      %v716 = vmin.f32 %v657, 0.0
      %v717 = vmin.f32 %v660, 0.0
      %v718 = vmin.f32 %v663, 0.0
      %v719 = vmin.f32 %v666, 0.0
      %v720 = vmin.f32 %v669, 0.0
      %v721 = vmin.f32 %v672, 0.0
      %v722 = vmin.f32 %v675, 0.0
      %v723 = vmin.f32 %v678, 0.0
      %v724 = vmin.f32 %v681, 0.0
      %v725 = vmin.f32 %v684, 0.0
      %v726 = vmin.f32 %v687, 0.0
      %v727 = vmin.f32 %v690, 0.0
      %v728 = vmin.f32 %v693, 0.0
      %v729 = vmin.f32 %v696, 0.0
      %v730 = vmul.f32 %v714, 1.442695
      %v731 = vpow.pop %v730
      %v732 = vmul.f32 %v715, 1.442695
      %v733 = vpow.pop %v732
      %v734 = vmul.f32 %v716, 1.442695
      %v735 = vpow.pop %v734
      %v736 = vmul.f32 %v717, 1.442695
      %v737 = vpow.pop %v736
      %v738 = vmul.f32 %v718, 1.442695
      %v739 = vpow.pop %v738
      %v740 = vmul.f32 %v719, 1.442695
      %v741 = vpow.pop %v740
      %v742 = vmul.f32 %v720, 1.442695
      %v743 = vpow.pop %v742
      %v744 = vmul.f32 %v721, 1.442695
      %v745 = vpow.pop %v744
      %v746 = vmul.f32 %v722, 1.442695
      %v747 = vpow.pop %v746
      %v748 = vmul.f32 %v723, 1.442695
      %v749 = vpow.pop %v748
      %v750 = vmul.f32 %v724, 1.442695
      %v751 = vpow.pop %v750
      %v752 = vmul.f32 %v725, 1.442695
      %v753 = vpow.pop %v752
      %v754 = vmul.f32 %v726, 1.442695
      %v755 = vpow.pop %v754
      %v756 = vmul.f32 %v727, 1.442695
      %v757 = vpow.pop %v756
      %v758 = vmul.f32 %v728, 1.442695
      %v759 = vpow.pop %v758
      %v760 = vmul.f32 %v729, 1.442695
      %v761 = vpow.pop %v760
      %v762 = vsub.f32 %v731, 1.0
      %v763 = vsub.f32 %v733, 1.0
      %v764 = vsub.f32 %v735, 1.0
      %v765 = vsub.f32 %v737, 1.0
      %v766 = vsub.f32 %v739, 1.0
      %v767 = vsub.f32 %v741, 1.0
      %v768 = vsub.f32 %v743, 1.0
      %v769 = vsub.f32 %v745, 1.0
      %v770 = vsub.f32 %v747, 1.0
      %v771 = vsub.f32 %v749, 1.0
      %v772 = vsub.f32 %v751, 1.0
      %v773 = vsub.f32 %v753, 1.0
      %v774 = vsub.f32 %v755, 1.0
      %v775 = vsub.f32 %v757, 1.0
      %v776 = vsub.f32 %v759, 1.0
      %v777 = vsub.f32 %v761, 1.0
      %v778 = vsel %vm698, %v651, %v762
      %v779 = vsel %vm699, %v654, %v763
      %v780 = vsel %vm700, %v657, %v764
      %v781 = vsel %vm701, %v660, %v765
      %v782 = vsel %vm702, %v663, %v766
      %v783 = vsel %vm703, %v666, %v767
      %v784 = vsel %vm704, %v669, %v768
      %v785 = vsel %vm705, %v672, %v769
      %v786 = vsel %vm706, %v675, %v770
      %v787 = vsel %vm707, %v678, %v771
      %v788 = vsel %vm708, %v681, %v772
      %v789 = vsel %vm709, %v684, %v773
      %v790 = vsel %vm710, %v687, %v774
      %v791 = vsel %vm711, %v690, %v775
      %v792 = vsel %vm712, %v693, %v776
      %v793 = vsel %vm713, %v696, %v777
      %v794 = vld [vmem:[%s3] sm:$0xff]
      %v795 = vld [vmem:[%s3 + $0x8] sm:$0xff]
      %v796 = vld [vmem:[%s3 + $0x10] sm:$0xff]
      %v797 = vld [vmem:[%s3 + $0x18] sm:$0xff]
      %v798 = vld [vmem:[%s3 + $0x20] sm:$0xff]
      %v799 = vld [vmem:[%s3 + $0x28] sm:$0xff]
      %v800 = vld [vmem:[%s3 + $0x30] sm:$0xff]
      %v801 = vld [vmem:[%s3 + $0x38] sm:$0xff]
      %v802 = vld [vmem:[%s3 + $0x40] sm:$0xff]
      %v803 = vld [vmem:[%s3 + $0x48] sm:$0xff]
      %v804 = vld [vmem:[%s3 + $0x50] sm:$0xff]
      %v805 = vld [vmem:[%s3 + $0x58] sm:$0xff]
      %v806 = vld [vmem:[%s3 + $0x60] sm:$0xff]
      %v807 = vld [vmem:[%s3 + $0x68] sm:$0x1]
      %v809 = vsel %vm262, %v778, 0
      %v812 = vsel %vm262, %v779, 0
      %v815 = vsel %vm262, %v780, 0
      %v818 = vsel %vm262, %v781, 0
      %v821 = vsel %vm262, %v782, 0
      %v824 = vsel %vm262, %v783, 0
      %v827 = vsel %vm262, %v784, 0
      %v830 = vsel %vm262, %v785, 0
      %v833 = vsel %vm262, %v786, 0
      %v836 = vsel %vm262, %v787, 0
      %v839 = vsel %vm262, %v788, 0
      %v842 = vsel %vm262, %v789, 0
      %v845 = vsel %vm262, %v790, 0
      %v848 = vsel %vm262, %v791, 0
      %v851 = vsel %vm262, %v792, 0
      %v854 = vsel %vm262, %v793, 0
      %vm856 = vcmask 1040384
      %v858 = vsel %vm856, %v807, 0
      %860 = vmatpush.msra.mxu0 0.0
      %861 = vmatpush.msra.mxu0 0.0
      %862 = vmatpush.msra.mxu0 %v858
      %863 = vmatpush.msra.mxu0 %v806
      %864 = vmatpush.msra.mxu0 %v805
      %865 = vmatpush.msra.mxu0 %v804
      %866 = vmatpush.msra.mxu0 %v803
      %867 = vmatpush.msra.mxu0 %v802
      %868 = vmatpush.msra.mxu0 %v801
      %869 = vmatpush.msra.mxu0 %v800
      %870 = vmatpush.msra.mxu0 %v799
      %871 = vmatpush.msra.mxu0 %v798
      %872 = vmatpush.msra.mxu0 %v797
      %873 = vmatpush.msra.mxu0 %v796
      %874 = vmatpush.msra.mxu0 %v795
      %875 = vmatpush.msra.mxu0 %v794
      %876 = vmatmul.f32.gmra.mxu0 %v809
      %v877 = vpop.f32.mrf.mxu0
      %v878 = vadd.f32 0.0, %v877
      %879 = vmatmul.f32.gmra.mxu0 %v812
      %v880 = vpop.f32.mrf.mxu0
      %v881 = vadd.f32 0.0, %v880
      %882 = vmatmul.f32.gmra.mxu0 %v815
      %v883 = vpop.f32.mrf.mxu0
      %v884 = vadd.f32 0.0, %v883
      %885 = vmatmul.f32.gmra.mxu0 %v818
      %v886 = vpop.f32.mrf.mxu0
      %v887 = vadd.f32 0.0, %v886
      %888 = vmatmul.f32.gmra.mxu0 %v821
      %v889 = vpop.f32.mrf.mxu0
      %v890 = vadd.f32 0.0, %v889
      %891 = vmatmul.f32.gmra.mxu0 %v824
      %v892 = vpop.f32.mrf.mxu0
      %v893 = vadd.f32 0.0, %v892
      %894 = vmatmul.f32.gmra.mxu0 %v827
      %v895 = vpop.f32.mrf.mxu0
      %v896 = vadd.f32 0.0, %v895
      %897 = vmatmul.f32.gmra.mxu0 %v830
      %v898 = vpop.f32.mrf.mxu0
      %v899 = vadd.f32 0.0, %v898
      %900 = vmatmul.f32.gmra.mxu0 %v833
      %v901 = vpop.f32.mrf.mxu0
      %v902 = vadd.f32 0.0, %v901
      %903 = vmatmul.f32.gmra.mxu0 %v836
      %v904 = vpop.f32.mrf.mxu0
      %v905 = vadd.f32 0.0, %v904
      %906 = vmatmul.f32.gmra.mxu0 %v839
      %v907 = vpop.f32.mrf.mxu0
      %v908 = vadd.f32 0.0, %v907
      %909 = vmatmul.f32.gmra.mxu0 %v842
      %v910 = vpop.f32.mrf.mxu0
      %v911 = vadd.f32 0.0, %v910
      %912 = vmatmul.f32.gmra.mxu0 %v845
      %v913 = vpop.f32.mrf.mxu0
      %v914 = vadd.f32 0.0, %v913
      %915 = vmatmul.f32.gmra.mxu0 %v848
      %v916 = vpop.f32.mrf.mxu0
      %v917 = vadd.f32 0.0, %v916
      %918 = vmatmul.f32.gmra.mxu0 %v851
      %v919 = vpop.f32.mrf.mxu0
      %v920 = vadd.f32 0.0, %v919
      %921 = vmatmul.f32.gmra.mxu0 %v854
      %v922 = vpop.f32.mrf.mxu0
      %v923 = vadd.f32 0.0, %v922
      %924 = vdwg.mxu0
      %v925 = vmul.f32 %v878, 0.013333334
      %v926 = vmul.f32 %v881, 0.013333334
      %v927 = vmul.f32 %v884, 0.013333334
      %v928 = vmul.f32 %v887, 0.013333334
      %v929 = vmul.f32 %v890, 0.013333334
      %v930 = vmul.f32 %v893, 0.013333334
      %v931 = vmul.f32 %v896, 0.013333334
      %v932 = vmul.f32 %v899, 0.013333334
      %v933 = vmul.f32 %v902, 0.013333334
      %v934 = vmul.f32 %v905, 0.013333334
      %v935 = vmul.f32 %v908, 0.013333334
      %v936 = vmul.f32 %v911, 0.013333334
      %v937 = vmul.f32 %v914, 0.013333334
      %v938 = vmul.f32 %v917, 0.013333334
      %v939 = vmul.f32 %v920, 0.013333334
      %v940 = vmul.f32 %v923, 0.013333334
      %v941 = vld [vmem:[%s4] sm:$0xff]
      %v942 = vld [vmem:[%s4 + $0x8] sm:$0xff]
      %v943 = vld [vmem:[%s4 + $0x10] sm:$0xff]
      %v944 = vld [vmem:[%s4 + $0x18] sm:$0xff]
      %v945 = vld [vmem:[%s4 + $0x20] sm:$0xff]
      %v946 = vld [vmem:[%s4 + $0x28] sm:$0xff]
      %v947 = vld [vmem:[%s4 + $0x30] sm:$0xff]
      %v948 = vld [vmem:[%s4 + $0x38] sm:$0xff]
      %v949 = vld [vmem:[%s4 + $0x40] sm:$0xff]
      %v950 = vld [vmem:[%s4 + $0x48] sm:$0xff]
      %v951 = vld [vmem:[%s4 + $0x50] sm:$0xff]
      %v952 = vld [vmem:[%s4 + $0x58] sm:$0xff]
      %v953 = vld [vmem:[%s4 + $0x60] sm:$0xff]
      %v954 = vld [vmem:[%s4 + $0x68] sm:$0xff]
      %v955 = vld [vmem:[%s4 + $0x70] sm:$0xff]
      %v956 = vld [vmem:[%s4 + $0x78] sm:$0xff]
      %v957 = vld [vmem:[%s5] sm:$0xff]
      %v958 = vld [vmem:[%s5 + $0x8] sm:$0xff]
      %v959 = vld [vmem:[%s5 + $0x10] sm:$0xff]
      %v960 = vld [vmem:[%s5 + $0x18] sm:$0xff]
      %v961 = vld [vmem:[%s5 + $0x20] sm:$0xff]
      %v962 = vld [vmem:[%s5 + $0x28] sm:$0xff]
      %v963 = vld [vmem:[%s5 + $0x30] sm:$0xff]
      %v964 = vld [vmem:[%s5 + $0x38] sm:$0xff]
      %v965 = vld [vmem:[%s5 + $0x40] sm:$0xff]
      %v966 = vld [vmem:[%s5 + $0x48] sm:$0xff]
      %v967 = vld [vmem:[%s5 + $0x50] sm:$0xff]
      %v968 = vld [vmem:[%s5 + $0x58] sm:$0xff]
      %v969 = vld [vmem:[%s5 + $0x60] sm:$0xff]
      %v970 = vld [vmem:[%s5 + $0x68] sm:$0xff]
      %v971 = vld [vmem:[%s5 + $0x70] sm:$0xff]
      %v972 = vld [vmem:[%s5 + $0x78] sm:$0xff]
      %974 = vset.pattern.permute.xlu0 0
      %975 = vperm.xlu0 %974, %v957
      %v976 = vpop.permute.xlu0 %975
      %979 = vset.pattern.permute.xlu0 0
      %980 = vperm.xlu0 %979, %v958
      %v981 = vpop.permute.xlu0 %980
      %984 = vset.pattern.permute.xlu0 0
      %985 = vperm.xlu0 %984, %v959
      %v986 = vpop.permute.xlu0 %985
      %989 = vset.pattern.permute.xlu0 0
      %990 = vperm.xlu0 %989, %v960
      %v991 = vpop.permute.xlu0 %990
      %994 = vset.pattern.permute.xlu0 0
      %995 = vperm.xlu0 %994, %v961
      %v996 = vpop.permute.xlu0 %995
      %999 = vset.pattern.permute.xlu0 0
      %1000 = vperm.xlu0 %999, %v962
      %v1001 = vpop.permute.xlu0 %1000
      %1004 = vset.pattern.permute.xlu0 0
      %1005 = vperm.xlu0 %1004, %v963
      %v1006 = vpop.permute.xlu0 %1005
      %1009 = vset.pattern.permute.xlu0 0
      %1010 = vperm.xlu0 %1009, %v964
      %v1011 = vpop.permute.xlu0 %1010
      %1014 = vset.pattern.permute.xlu0 0
      %1015 = vperm.xlu0 %1014, %v965
      %v1016 = vpop.permute.xlu0 %1015
      %1019 = vset.pattern.permute.xlu0 0
      %1020 = vperm.xlu0 %1019, %v966
      %v1021 = vpop.permute.xlu0 %1020
      %1024 = vset.pattern.permute.xlu0 0
      %1025 = vperm.xlu0 %1024, %v967
      %v1026 = vpop.permute.xlu0 %1025
      %1029 = vset.pattern.permute.xlu0 0
      %1030 = vperm.xlu0 %1029, %v968
      %v1031 = vpop.permute.xlu0 %1030
      %1034 = vset.pattern.permute.xlu0 0
      %1035 = vperm.xlu0 %1034, %v969
      %v1036 = vpop.permute.xlu0 %1035
      %1039 = vset.pattern.permute.xlu0 0
      %1040 = vperm.xlu0 %1039, %v970
      %v1041 = vpop.permute.xlu0 %1040
      %1044 = vset.pattern.permute.xlu0 0
      %1045 = vperm.xlu0 %1044, %v971
      %v1046 = vpop.permute.xlu0 %1045
      %1049 = vset.pattern.permute.xlu0 0
      %1050 = vperm.xlu0 %1049, %v972
      %v1051 = vpop.permute.xlu0 %1050
      %1053 = vmatpush.msra.mxu0 %v940
      %1054 = vmatpush.msra.mxu0 %v939
      %1055 = vmatpush.msra.mxu0 %v938
      %1056 = vmatpush.msra.mxu0 %v937
      %1057 = vmatpush.msra.mxu0 %v936
      %1058 = vmatpush.msra.mxu0 %v935
      %1059 = vmatpush.msra.mxu0 %v934
      %1060 = vmatpush.msra.mxu0 %v933
      %1061 = vmatpush.msra.mxu0 %v932
      %1062 = vmatpush.msra.mxu0 %v931
      %1063 = vmatpush.msra.mxu0 %v930
      %1064 = vmatpush.msra.mxu0 %v929
      %1065 = vmatpush.msra.mxu0 %v928
      %1066 = vmatpush.msra.mxu0 %v927
      %1067 = vmatpush.msra.mxu0 %v926
      %1068 = vmatpush.msra.mxu0 %v925
      %1069 = vmatmul.f32.gmra.mxu0 %v941
      %v1070 = vpop.f32.mrf.mxu0
      %v1071 = vadd.f32 %v976, %v1070
      %1072 = vmatmul.f32.gmra.mxu0 %v942
      %v1073 = vpop.f32.mrf.mxu0
      %v1074 = vadd.f32 %v981, %v1073
      %1075 = vmatmul.f32.gmra.mxu0 %v943
      %v1076 = vpop.f32.mrf.mxu0
      %v1077 = vadd.f32 %v986, %v1076
      %1078 = vmatmul.f32.gmra.mxu0 %v944
      %v1079 = vpop.f32.mrf.mxu0
      %v1080 = vadd.f32 %v991, %v1079
      %1081 = vmatmul.f32.gmra.mxu0 %v945
      %v1082 = vpop.f32.mrf.mxu0
      %v1083 = vadd.f32 %v996, %v1082
      %1084 = vmatmul.f32.gmra.mxu0 %v946
      %v1085 = vpop.f32.mrf.mxu0
      %v1086 = vadd.f32 %v1001, %v1085
      %1087 = vmatmul.f32.gmra.mxu0 %v947
      %v1088 = vpop.f32.mrf.mxu0
      %v1089 = vadd.f32 %v1006, %v1088
      %1090 = vmatmul.f32.gmra.mxu0 %v948
      %v1091 = vpop.f32.mrf.mxu0
      %v1092 = vadd.f32 %v1011, %v1091
      %1093 = vmatmul.f32.gmra.mxu0 %v949
      %v1094 = vpop.f32.mrf.mxu0
      %v1095 = vadd.f32 %v1016, %v1094
      %1096 = vmatmul.f32.gmra.mxu0 %v950
      %v1097 = vpop.f32.mrf.mxu0
      %v1098 = vadd.f32 %v1021, %v1097
      %1099 = vmatmul.f32.gmra.mxu0 %v951
      %v1100 = vpop.f32.mrf.mxu0
      %v1101 = vadd.f32 %v1026, %v1100
      %1102 = vmatmul.f32.gmra.mxu0 %v952
      %v1103 = vpop.f32.mrf.mxu0
      %v1104 = vadd.f32 %v1031, %v1103
      %1105 = vmatmul.f32.gmra.mxu0 %v953
      %v1106 = vpop.f32.mrf.mxu0
      %v1107 = vadd.f32 %v1036, %v1106
      %1108 = vmatmul.f32.gmra.mxu0 %v954
      %v1109 = vpop.f32.mrf.mxu0
      %v1110 = vadd.f32 %v1041, %v1109
      %1111 = vmatmul.f32.gmra.mxu0 %v955
      %v1112 = vpop.f32.mrf.mxu0
      %v1113 = vadd.f32 %v1046, %v1112
      %1114 = vmatmul.f32.gmra.mxu0 %v956
      %v1115 = vpop.f32.mrf.mxu0
      %v1116 = vadd.f32 %v1051, %v1115
      %1117 = vdwg.mxu0
      %vm1118 = vcmask 64512
      %1119 = vst.msk [vmem:[%s258] sm:$0xff] %vm1118, %v1071
      %1120 = vst.msk [vmem:[%s258 + $0x8] sm:$0xff] %vm1118, %v1074
      %1121 = vst.msk [vmem:[%s258 + $0x10] sm:$0xff] %vm1118, %v1077
      %1122 = vst.msk [vmem:[%s258 + $0x18] sm:$0xff] %vm1118, %v1080
      %1123 = vst.msk [vmem:[%s258 + $0x20] sm:$0xff] %vm1118, %v1083
      %1124 = vst.msk [vmem:[%s258 + $0x28] sm:$0xff] %vm1118, %v1086
      %1125 = vst.msk [vmem:[%s258 + $0x30] sm:$0xff] %vm1118, %v1089
      %1126 = vst.msk [vmem:[%s258 + $0x38] sm:$0xff] %vm1118, %v1092
      %1127 = vst.msk [vmem:[%s258 + $0x40] sm:$0xff] %vm1118, %v1095
      %1128 = vst.msk [vmem:[%s258 + $0x48] sm:$0xff] %vm1118, %v1098
      %1129 = vst.msk [vmem:[%s258 + $0x50] sm:$0xff] %vm1118, %v1101
      %1130 = vst.msk [vmem:[%s258 + $0x58] sm:$0xff] %vm1118, %v1104
      %1131 = vst.msk [vmem:[%s258 + $0x60] sm:$0xff] %vm1118, %v1107
      %1132 = vst.msk [vmem:[%s258 + $0x68] sm:$0xff] %vm1118, %v1110
      %1133 = vst.msk [vmem:[%s258 + $0x70] sm:$0xff] %vm1118, %v1113
      %1134 = vst.msk [vmem:[%s258 + $0x78] sm:$0xff] %vm1118, %v1116
      %s1135 = scalar_lea.vmem %s251, 16
      %v1136 = vld [vmem:[%s1135] sm:$0xff]
      %v1137 = vld [vmem:[%s1135 + $0x8] sm:$0xff]
      %1138 = vst.msk [vmem:[#allocation2] sm:$0xff] %vm262, %v1136
      %1140 = vrot.lane.b32.xlu0 %v1136, 127
      %v1141 = vpop.permute.xlu0 %1140
      %1143 = vst.msk [vmem:[#allocation2 + $0x8] sm:$0xff] %vm262, %v1141
      %1144 = vrot.lane.b32.xlu0 %v1136, 126
      %v1145 = vpop.permute.xlu0 %1144
      %1147 = vst.msk [vmem:[#allocation2 + $0x10] sm:$0xff] %vm262, %v1145
      %1148 = vrot.lane.b32.xlu0 %v1136, 125
      %v1149 = vpop.permute.xlu0 %1148
      %1151 = vst.msk [vmem:[#allocation2 + $0x18] sm:$0xff] %vm262, %v1149
      %1152 = vrot.lane.b32.xlu0 %v1136, 124
      %v1153 = vpop.permute.xlu0 %1152
      %1155 = vst.msk [vmem:[#allocation2 + $0x20] sm:$0xff] %vm262, %v1153
      %1156 = vrot.lane.b32.xlu0 %v1136, 123
      %v1157 = vpop.permute.xlu0 %1156
      %1159 = vst.msk [vmem:[#allocation2 + $0x28] sm:$0xff] %vm262, %v1157
      %1160 = vrot.lane.b32.xlu0 %v1136, 122
      %v1161 = vpop.permute.xlu0 %1160
      %1163 = vst.msk [vmem:[#allocation2 + $0x30] sm:$0xff] %vm262, %v1161
      %1164 = vrot.lane.b32.xlu0 %v1136, 121
      %v1165 = vpop.permute.xlu0 %1164
      %1167 = vst.msk [vmem:[#allocation2 + $0x38] sm:$0xff] %vm262, %v1165
      %1168 = vrot.lane.b32.xlu0 %v1136, 120
      %v1169 = vpop.permute.xlu0 %1168
      %1171 = vst.msk [vmem:[#allocation2 + $0x40] sm:$0xff] %vm262, %v1169
      %1172 = vrot.lane.b32.xlu0 %v1136, 119
      %v1173 = vpop.permute.xlu0 %1172
      %1175 = vst.msk [vmem:[#allocation2 + $0x48] sm:$0xff] %vm262, %v1173
      %1176 = vrot.lane.b32.xlu0 %v1136, 118
      %v1177 = vpop.permute.xlu0 %1176
      %1179 = vst.msk [vmem:[#allocation2 + $0x50] sm:$0xff] %vm262, %v1177
      %1180 = vrot.lane.b32.xlu0 %v1136, 117
      %v1181 = vpop.permute.xlu0 %1180
      %1183 = vst.msk [vmem:[#allocation2 + $0x58] sm:$0xff] %vm262, %v1181
      %1184 = vrot.lane.b32.xlu0 %v1136, 116
      %v1185 = vpop.permute.xlu0 %1184
      %1187 = vst.msk [vmem:[#allocation2 + $0x60] sm:$0xff] %vm262, %v1185
      %1188 = vrot.lane.b32.xlu0 %v1136, 115
      %v1189 = vpop.permute.xlu0 %1188
      %1191 = vst.msk [vmem:[#allocation2 + $0x68] sm:$0xff] %vm262, %v1189
      %1192 = vrot.lane.b32.xlu0 %v1136, 114
      %v1193 = vpop.permute.xlu0 %1192
      %1195 = vst.msk [vmem:[#allocation2 + $0x70] sm:$0xff] %vm262, %v1193
      %1196 = vrot.lane.b32.xlu0 %v1136, 113
      %v1197 = vpop.permute.xlu0 %1196
      %1199 = vst.msk [vmem:[#allocation2 + $0x78] sm:$0xff] %vm262, %v1197
      %1200 = vrot.lane.b32.xlu0 %v1136, 112
      %v1201 = vpop.permute.xlu0 %1200
      %1203 = vst.msk [vmem:[#allocation2 + $0x80] sm:$0xff] %vm262, %v1201
      %1204 = vrot.lane.b32.xlu0 %v1136, 111
      %v1205 = vpop.permute.xlu0 %1204
      %1207 = vst.msk [vmem:[#allocation2 + $0x88] sm:$0xff] %vm262, %v1205
      %1208 = vrot.lane.b32.xlu0 %v1136, 110
      %v1209 = vpop.permute.xlu0 %1208
      %1211 = vst.msk [vmem:[#allocation2 + $0x90] sm:$0xff] %vm262, %v1209
      %1212 = vrot.lane.b32.xlu0 %v1136, 109
      %v1213 = vpop.permute.xlu0 %1212
      %1215 = vst.msk [vmem:[#allocation2 + $0x98] sm:$0xff] %vm262, %v1213
      %1216 = vrot.lane.b32.xlu0 %v1136, 108
      %v1217 = vpop.permute.xlu0 %1216
      %1219 = vst.msk [vmem:[#allocation2 + $0xa0] sm:$0xff] %vm262, %v1217
      %1220 = vrot.lane.b32.xlu0 %v1136, 107
      %v1221 = vpop.permute.xlu0 %1220
      %1223 = vst.msk [vmem:[#allocation2 + $0xa8] sm:$0xff] %vm262, %v1221
      %1224 = vrot.lane.b32.xlu0 %v1136, 106
      %v1225 = vpop.permute.xlu0 %1224
      %1227 = vst.msk [vmem:[#allocation2 + $0xb0] sm:$0xff] %vm262, %v1225
      %1228 = vrot.lane.b32.xlu0 %v1136, 105
      %v1229 = vpop.permute.xlu0 %1228
      %1231 = vst.msk [vmem:[#allocation2 + $0xb8] sm:$0xff] %vm262, %v1229
      %1233 = vrot.lane.b32.xlu0 %v1136, 104
      %v1234 = vpop.permute.xlu0 %1233
      %1235 = vrot.lane.b32.xlu0 %v1137, 104
      %v1236 = vpop.permute.xlu0 %1235
      %v1237 = vsel %vm362, %v1234, %v1236
      %1239 = vst.msk [vmem:[#allocation2 + $0xc0] sm:$0xff] %vm262, %v1237
      %v1240 = vld [vmem:[%s1] sm:$0xff]
      %v1241 = vld [vmem:[%s1 + $0x8] sm:$0xff]
      %v1242 = vld [vmem:[%s1 + $0x10] sm:$0xff]
      %v1243 = vld [vmem:[%s1 + $0x18] sm:$0xff]
      %v1244 = vld [vmem:[%s1 + $0x20] sm:$0xff]
      %v1245 = vld [vmem:[%s1 + $0x28] sm:$0xff]
      %v1246 = vld [vmem:[%s1 + $0x30] sm:$0xff]
      %v1247 = vld [vmem:[%s1 + $0x38] sm:$0xff]
      %v1248 = vld [vmem:[%s1 + $0x40] sm:$0xff]
      %v1249 = vld [vmem:[%s1 + $0x48] sm:$0xff]
      %v1250 = vld [vmem:[%s1 + $0x50] sm:$0xff]
      %v1251 = vld [vmem:[%s1 + $0x58] sm:$0xff]
      %v1252 = vld [vmem:[%s1 + $0x60] sm:$0xff]
      %v1253 = vld [vmem:[%s1 + $0x68] sm:$0xff]
      %v1254 = vld [vmem:[%s1 + $0x70] sm:$0xff]
      %v1255 = vld [vmem:[%s1 + $0x78] sm:$0xff]
      %v1256 = vld [vmem:[%s1 + $0x80] sm:$0xff]
      %v1257 = vld [vmem:[%s1 + $0x88] sm:$0xff]
      %v1258 = vld [vmem:[%s1 + $0x90] sm:$0xff]
      %v1259 = vld [vmem:[%s1 + $0x98] sm:$0xff]
      %v1260 = vld [vmem:[%s1 + $0xa0] sm:$0xff]
      %v1261 = vld [vmem:[%s1 + $0xa8] sm:$0xff]
      %v1262 = vld [vmem:[%s1 + $0xb0] sm:$0xff]
      %v1263 = vld [vmem:[%s1 + $0xb8] sm:$0xff]
      %v1264 = vld [vmem:[%s1 + $0xc0] sm:$0xff]
      %v1265 = vld [vmem:[%s1 + $0xc8] sm:$0xff]
      %v1266 = vld [vmem:[%s1 + $0xd0] sm:$0xff]
      %v1267 = vld [vmem:[%s1 + $0xd8] sm:$0xff]
      %v1268 = vld [vmem:[%s1 + $0xe0] sm:$0xff]
      %v1269 = vld [vmem:[%s1 + $0xe8] sm:$0xff]
      %v1270 = vld [vmem:[%s1 + $0xf0] sm:$0xff]
      %v1271 = vld [vmem:[%s1 + $0xf8] sm:$0xff]
      %v1272 = vld [vmem:[#allocation2] sm:$0xff]
      %v1273 = vld [vmem:[#allocation2 + $0x8] sm:$0xff]
      %v1274 = vld [vmem:[#allocation2 + $0x10] sm:$0xff]
      %v1275 = vld [vmem:[#allocation2 + $0x18] sm:$0xff]
      %v1276 = vld [vmem:[#allocation2 + $0x20] sm:$0xff]
      %v1277 = vld [vmem:[#allocation2 + $0x28] sm:$0xff]
      %v1278 = vld [vmem:[#allocation2 + $0x30] sm:$0xff]
      %v1279 = vld [vmem:[#allocation2 + $0x38] sm:$0xff]
      %v1280 = vld [vmem:[#allocation2 + $0x40] sm:$0xff]
      %v1281 = vld [vmem:[#allocation2 + $0x48] sm:$0xff]
      %v1282 = vld [vmem:[#allocation2 + $0x50] sm:$0xff]
      %v1283 = vld [vmem:[#allocation2 + $0x58] sm:$0xff]
      %v1284 = vld [vmem:[#allocation2 + $0x60] sm:$0xff]
      %v1285 = vld [vmem:[#allocation2 + $0x68] sm:$0xff]
      %v1286 = vld [vmem:[#allocation2 + $0x70] sm:$0xff]
      %v1287 = vld [vmem:[#allocation2 + $0x78] sm:$0xff]
      %v1288 = vld [vmem:[#allocation2 + $0x80] sm:$0xff]
      %v1289 = vld [vmem:[#allocation2 + $0x88] sm:$0xff]
      %v1290 = vld [vmem:[#allocation2 + $0x90] sm:$0xff]
      %v1291 = vld [vmem:[#allocation2 + $0x98] sm:$0xff]
      %v1292 = vld [vmem:[#allocation2 + $0xa0] sm:$0xff]
      %v1293 = vld [vmem:[#allocation2 + $0xa8] sm:$0xff]
      %v1294 = vld [vmem:[#allocation2 + $0xb0] sm:$0xff]
      %v1295 = vld [vmem:[#allocation2 + $0xb8] sm:$0xff]
      %v1296 = vld [vmem:[#allocation2 + $0xc0] sm:$0xff]
      %v1297 = vld [vmem:[%s2] sm:$0xff]
      %v1298 = vld [vmem:[%s2 + $0x8] sm:$0xff]
      %v1299 = vld [vmem:[%s2 + $0x10] sm:$0xff]
      %v1300 = vld [vmem:[%s2 + $0x18] sm:$0xff]
      %v1301 = vld [vmem:[%s2 + $0x20] sm:$0xff]
      %v1302 = vld [vmem:[%s2 + $0x28] sm:$0xff]
      %v1303 = vld [vmem:[%s2 + $0x30] sm:$0xff]
      %v1304 = vld [vmem:[%s2 + $0x38] sm:$0xff]
      %v1305 = vld [vmem:[%s2 + $0x40] sm:$0xff]
      %v1306 = vld [vmem:[%s2 + $0x48] sm:$0xff]
      %v1307 = vld [vmem:[%s2 + $0x50] sm:$0xff]
      %v1308 = vld [vmem:[%s2 + $0x58] sm:$0xff]
      %v1309 = vld [vmem:[%s2 + $0x60] sm:$0xff]
      %v1310 = vld [vmem:[%s2 + $0x68] sm:$0xff]
      %v1311 = vld [vmem:[%s2 + $0x70] sm:$0xff]
      %v1312 = vld [vmem:[%s2 + $0x78] sm:$0xff]
      %1314 = vset.pattern.permute.xlu0 0
      %1315 = vperm.xlu0 %1314, %v1297
      %v1316 = vpop.permute.xlu0 %1315
      %1319 = vset.pattern.permute.xlu0 0
      %1320 = vperm.xlu0 %1319, %v1298
      %v1321 = vpop.permute.xlu0 %1320
      %1324 = vset.pattern.permute.xlu0 0
      %1325 = vperm.xlu0 %1324, %v1299
      %v1326 = vpop.permute.xlu0 %1325
      %1329 = vset.pattern.permute.xlu0 0
      %1330 = vperm.xlu0 %1329, %v1300
      %v1331 = vpop.permute.xlu0 %1330
      %1334 = vset.pattern.permute.xlu0 0
      %1335 = vperm.xlu0 %1334, %v1301
      %v1336 = vpop.permute.xlu0 %1335
      %1339 = vset.pattern.permute.xlu0 0
      %1340 = vperm.xlu0 %1339, %v1302
      %v1341 = vpop.permute.xlu0 %1340
      %1344 = vset.pattern.permute.xlu0 0
      %1345 = vperm.xlu0 %1344, %v1303
      %v1346 = vpop.permute.xlu0 %1345
      %1349 = vset.pattern.permute.xlu0 0
      %1350 = vperm.xlu0 %1349, %v1304
      %v1351 = vpop.permute.xlu0 %1350
      %1354 = vset.pattern.permute.xlu0 0
      %1355 = vperm.xlu0 %1354, %v1305
      %v1356 = vpop.permute.xlu0 %1355
      %1359 = vset.pattern.permute.xlu0 0
      %1360 = vperm.xlu0 %1359, %v1306
      %v1361 = vpop.permute.xlu0 %1360
      %1364 = vset.pattern.permute.xlu0 0
      %1365 = vperm.xlu0 %1364, %v1307
      %v1366 = vpop.permute.xlu0 %1365
      %1369 = vset.pattern.permute.xlu0 0
      %1370 = vperm.xlu0 %1369, %v1308
      %v1371 = vpop.permute.xlu0 %1370
      %1374 = vset.pattern.permute.xlu0 0
      %1375 = vperm.xlu0 %1374, %v1309
      %v1376 = vpop.permute.xlu0 %1375
      %1379 = vset.pattern.permute.xlu0 0
      %1380 = vperm.xlu0 %1379, %v1310
      %v1381 = vpop.permute.xlu0 %1380
      %1384 = vset.pattern.permute.xlu0 0
      %1385 = vperm.xlu0 %1384, %v1311
      %v1386 = vpop.permute.xlu0 %1385
      %1389 = vset.pattern.permute.xlu0 0
      %1390 = vperm.xlu0 %1389, %v1312
      %v1391 = vpop.permute.xlu0 %1390
      %v1394 = vsel %vm519, %v1241, 0
      %v1397 = vsel %vm519, %v1243, 0
      %v1400 = vsel %vm519, %v1245, 0
      %v1403 = vsel %vm519, %v1247, 0
      %v1406 = vsel %vm519, %v1249, 0
      %v1409 = vsel %vm519, %v1251, 0
      %v1412 = vsel %vm519, %v1253, 0
      %v1415 = vsel %vm519, %v1255, 0
      %v1418 = vsel %vm519, %v1257, 0
      %v1421 = vsel %vm519, %v1259, 0
      %v1424 = vsel %vm519, %v1261, 0
      %v1427 = vsel %vm519, %v1263, 0
      %v1430 = vsel %vm519, %v1265, 0
      %v1433 = vsel %vm519, %v1267, 0
      %v1436 = vsel %vm519, %v1269, 0
      %v1439 = vsel %vm519, %v1271, 0
      %1441 = vmatpush.msra.mxu0 %v1287
      %1442 = vmatpush.msra.mxu0 %v1286
      %1443 = vmatpush.msra.mxu0 %v1285
      %1444 = vmatpush.msra.mxu0 %v1284
      %1445 = vmatpush.msra.mxu0 %v1283
      %1446 = vmatpush.msra.mxu0 %v1282
      %1447 = vmatpush.msra.mxu0 %v1281
      %1448 = vmatpush.msra.mxu0 %v1280
      %1449 = vmatpush.msra.mxu0 %v1279
      %1450 = vmatpush.msra.mxu0 %v1278
      %1451 = vmatpush.msra.mxu0 %v1277
      %1452 = vmatpush.msra.mxu0 %v1276
      %1453 = vmatpush.msra.mxu0 %v1275
      %1454 = vmatpush.msra.mxu0 %v1274
      %1455 = vmatpush.msra.mxu0 %v1273
      %1456 = vmatpush.msra.mxu0 %v1272
      %1457 = vmatmul.f32.gmra.mxu0 %v1240
      %v1458 = vpop.f32.mrf.mxu0
      %v1459 = vadd.f32 %v1316, %v1458
      %1460 = vmatmul.f32.gmra.mxu0 %v1242
      %v1461 = vpop.f32.mrf.mxu0
      %v1462 = vadd.f32 %v1321, %v1461
      %1463 = vmatmul.f32.gmra.mxu0 %v1244
      %v1464 = vpop.f32.mrf.mxu0
      %v1465 = vadd.f32 %v1326, %v1464
      %1466 = vmatmul.f32.gmra.mxu0 %v1246
      %v1467 = vpop.f32.mrf.mxu0
      %v1468 = vadd.f32 %v1331, %v1467
      %1469 = vmatmul.f32.gmra.mxu0 %v1248
      %v1470 = vpop.f32.mrf.mxu0
      %v1471 = vadd.f32 %v1336, %v1470
      %1472 = vmatmul.f32.gmra.mxu0 %v1250
      %v1473 = vpop.f32.mrf.mxu0
      %v1474 = vadd.f32 %v1341, %v1473
      %1475 = vmatmul.f32.gmra.mxu0 %v1252
      %v1476 = vpop.f32.mrf.mxu0
      %v1477 = vadd.f32 %v1346, %v1476
      %1478 = vmatmul.f32.gmra.mxu0 %v1254
      %v1479 = vpop.f32.mrf.mxu0
      %v1480 = vadd.f32 %v1351, %v1479
      %1481 = vmatmul.f32.gmra.mxu0 %v1256
      %v1482 = vpop.f32.mrf.mxu0
      %v1483 = vadd.f32 %v1356, %v1482
      %1484 = vmatmul.f32.gmra.mxu0 %v1258
      %v1485 = vpop.f32.mrf.mxu0
      %v1486 = vadd.f32 %v1361, %v1485
      %1487 = vmatmul.f32.gmra.mxu0 %v1260
      %v1488 = vpop.f32.mrf.mxu0
      %v1489 = vadd.f32 %v1366, %v1488
      %1490 = vmatmul.f32.gmra.mxu0 %v1262
      %v1491 = vpop.f32.mrf.mxu0
      %v1492 = vadd.f32 %v1371, %v1491
      %1493 = vmatmul.f32.gmra.mxu0 %v1264
      %v1494 = vpop.f32.mrf.mxu0
      %v1495 = vadd.f32 %v1376, %v1494
      %1496 = vmatmul.f32.gmra.mxu0 %v1266
      %v1497 = vpop.f32.mrf.mxu0
      %v1498 = vadd.f32 %v1381, %v1497
      %1499 = vmatmul.f32.gmra.mxu0 %v1268
      %v1500 = vpop.f32.mrf.mxu0
      %v1501 = vadd.f32 %v1386, %v1500
      %1502 = vmatmul.f32.gmra.mxu0 %v1270
      %v1503 = vpop.f32.mrf.mxu0
      %v1504 = vadd.f32 %v1391, %v1503
      %1505 = vdwg.mxu0
      %1506 = vmatpush.msra.mxu0 0.0
      %1507 = vmatpush.msra.mxu0 0.0
      %1508 = vmatpush.msra.mxu0 0.0
      %1509 = vmatpush.msra.mxu0 0.0
      %1510 = vmatpush.msra.mxu0 0.0
      %1511 = vmatpush.msra.mxu0 0.0
      %1512 = vmatpush.msra.mxu0 0.0
      %1513 = vmatpush.msra.mxu0 %v1296
      %1514 = vmatpush.msra.mxu0 %v1295
      %1515 = vmatpush.msra.mxu0 %v1294
      %1516 = vmatpush.msra.mxu0 %v1293
      %1517 = vmatpush.msra.mxu0 %v1292
      %1518 = vmatpush.msra.mxu0 %v1291
      %1519 = vmatpush.msra.mxu0 %v1290
      %1520 = vmatpush.msra.mxu0 %v1289
      %1521 = vmatpush.msra.mxu0 %v1288
      %1522 = vmatmul.f32.gmra.mxu0 %v1394
      %v1523 = vpop.f32.mrf.mxu0
      %v1524 = vadd.f32 %v1459, %v1523
      %1525 = vmatmul.f32.gmra.mxu0 %v1397
      %v1526 = vpop.f32.mrf.mxu0
      %v1527 = vadd.f32 %v1462, %v1526
      %1528 = vmatmul.f32.gmra.mxu0 %v1400
      %v1529 = vpop.f32.mrf.mxu0
      %v1530 = vadd.f32 %v1465, %v1529
      %1531 = vmatmul.f32.gmra.mxu0 %v1403
      %v1532 = vpop.f32.mrf.mxu0
      %v1533 = vadd.f32 %v1468, %v1532
      %1534 = vmatmul.f32.gmra.mxu0 %v1406
      %v1535 = vpop.f32.mrf.mxu0
      %v1536 = vadd.f32 %v1471, %v1535
      %1537 = vmatmul.f32.gmra.mxu0 %v1409
      %v1538 = vpop.f32.mrf.mxu0
      %v1539 = vadd.f32 %v1474, %v1538
      %1540 = vmatmul.f32.gmra.mxu0 %v1412
      %v1541 = vpop.f32.mrf.mxu0
      %v1542 = vadd.f32 %v1477, %v1541
      %1543 = vmatmul.f32.gmra.mxu0 %v1415
      %v1544 = vpop.f32.mrf.mxu0
      %v1545 = vadd.f32 %v1480, %v1544
      %1546 = vmatmul.f32.gmra.mxu0 %v1418
      %v1547 = vpop.f32.mrf.mxu0
      %v1548 = vadd.f32 %v1483, %v1547
      %1549 = vmatmul.f32.gmra.mxu0 %v1421
      %v1550 = vpop.f32.mrf.mxu0
      %v1551 = vadd.f32 %v1486, %v1550
      %1552 = vmatmul.f32.gmra.mxu0 %v1424
      %v1553 = vpop.f32.mrf.mxu0
      %v1554 = vadd.f32 %v1489, %v1553
      %1555 = vmatmul.f32.gmra.mxu0 %v1427
      %v1556 = vpop.f32.mrf.mxu0
      %v1557 = vadd.f32 %v1492, %v1556
      %1558 = vmatmul.f32.gmra.mxu0 %v1430
      %v1559 = vpop.f32.mrf.mxu0
      %v1560 = vadd.f32 %v1495, %v1559
      %1561 = vmatmul.f32.gmra.mxu0 %v1433
      %v1562 = vpop.f32.mrf.mxu0
      %v1563 = vadd.f32 %v1498, %v1562
      %1564 = vmatmul.f32.gmra.mxu0 %v1436
      %v1565 = vpop.f32.mrf.mxu0
      %v1566 = vadd.f32 %v1501, %v1565
      %1567 = vmatmul.f32.gmra.mxu0 %v1439
      %v1568 = vpop.f32.mrf.mxu0
      %v1569 = vadd.f32 %v1504, %v1568
      %1570 = vdwg.mxu0
      %vm1571 = vcmp.gt.f32.partialorder %v1524, 0.0
      %vm1572 = vcmp.gt.f32.partialorder %v1527, 0.0
      %vm1573 = vcmp.gt.f32.partialorder %v1530, 0.0
      %vm1574 = vcmp.gt.f32.partialorder %v1533, 0.0
      %vm1575 = vcmp.gt.f32.partialorder %v1536, 0.0
      %vm1576 = vcmp.gt.f32.partialorder %v1539, 0.0
      %vm1577 = vcmp.gt.f32.partialorder %v1542, 0.0
      %vm1578 = vcmp.gt.f32.partialorder %v1545, 0.0
      %vm1579 = vcmp.gt.f32.partialorder %v1548, 0.0
      %vm1580 = vcmp.gt.f32.partialorder %v1551, 0.0
      %vm1581 = vcmp.gt.f32.partialorder %v1554, 0.0
      %vm1582 = vcmp.gt.f32.partialorder %v1557, 0.0
      %vm1583 = vcmp.gt.f32.partialorder %v1560, 0.0
      %vm1584 = vcmp.gt.f32.partialorder %v1563, 0.0
      %vm1585 = vcmp.gt.f32.partialorder %v1566, 0.0
      %vm1586 = vcmp.gt.f32.partialorder %v1569, 0.0
      %v1587 = vmin.f32 %v1524, 0.0
      %v1588 = vmin.f32 %v1527, 0.0
      %v1589 = vmin.f32 %v1530, 0.0
      %v1590 = vmin.f32 %v1533, 0.0
      %v1591 = vmin.f32 %v1536, 0.0
      %v1592 = vmin.f32 %v1539, 0.0
      %v1593 = vmin.f32 %v1542, 0.0
      %v1594 = vmin.f32 %v1545, 0.0
      %v1595 = vmin.f32 %v1548, 0.0
      %v1596 = vmin.f32 %v1551, 0.0
      %v1597 = vmin.f32 %v1554, 0.0
      %v1598 = vmin.f32 %v1557, 0.0
      %v1599 = vmin.f32 %v1560, 0.0
      %v1600 = vmin.f32 %v1563, 0.0
      %v1601 = vmin.f32 %v1566, 0.0
      %v1602 = vmin.f32 %v1569, 0.0
      %v1603 = vmul.f32 %v1587, 1.442695
      %v1604 = vpow.pop %v1603
      %v1605 = vmul.f32 %v1588, 1.442695
      %v1606 = vpow.pop %v1605
      %v1607 = vmul.f32 %v1589, 1.442695
      %v1608 = vpow.pop %v1607
      %v1609 = vmul.f32 %v1590, 1.442695
      %v1610 = vpow.pop %v1609
      %v1611 = vmul.f32 %v1591, 1.442695
      %v1612 = vpow.pop %v1611
      %v1613 = vmul.f32 %v1592, 1.442695
      %v1614 = vpow.pop %v1613
      %v1615 = vmul.f32 %v1593, 1.442695
      %v1616 = vpow.pop %v1615
      %v1617 = vmul.f32 %v1594, 1.442695
      %v1618 = vpow.pop %v1617
      %v1619 = vmul.f32 %v1595, 1.442695
      %v1620 = vpow.pop %v1619
      %v1621 = vmul.f32 %v1596, 1.442695
      %v1622 = vpow.pop %v1621
      %v1623 = vmul.f32 %v1597, 1.442695
      %v1624 = vpow.pop %v1623
      %v1625 = vmul.f32 %v1598, 1.442695
      %v1626 = vpow.pop %v1625
      %v1627 = vmul.f32 %v1599, 1.442695
      %v1628 = vpow.pop %v1627
      %v1629 = vmul.f32 %v1600, 1.442695
      %v1630 = vpow.pop %v1629
      %v1631 = vmul.f32 %v1601, 1.442695
      %v1632 = vpow.pop %v1631
      %v1633 = vmul.f32 %v1602, 1.442695
      %v1634 = vpow.pop %v1633
      %v1635 = vsub.f32 %v1604, 1.0
      %v1636 = vsub.f32 %v1606, 1.0
      %v1637 = vsub.f32 %v1608, 1.0
      %v1638 = vsub.f32 %v1610, 1.0
      %v1639 = vsub.f32 %v1612, 1.0
      %v1640 = vsub.f32 %v1614, 1.0
      %v1641 = vsub.f32 %v1616, 1.0
      %v1642 = vsub.f32 %v1618, 1.0
      %v1643 = vsub.f32 %v1620, 1.0
      %v1644 = vsub.f32 %v1622, 1.0
      %v1645 = vsub.f32 %v1624, 1.0
      %v1646 = vsub.f32 %v1626, 1.0
      %v1647 = vsub.f32 %v1628, 1.0
      %v1648 = vsub.f32 %v1630, 1.0
      %v1649 = vsub.f32 %v1632, 1.0
      %v1650 = vsub.f32 %v1634, 1.0
      %v1651 = vsel %vm1571, %v1524, %v1635
      %v1652 = vsel %vm1572, %v1527, %v1636
      %v1653 = vsel %vm1573, %v1530, %v1637
      %v1654 = vsel %vm1574, %v1533, %v1638
      %v1655 = vsel %vm1575, %v1536, %v1639
      %v1656 = vsel %vm1576, %v1539, %v1640
      %v1657 = vsel %vm1577, %v1542, %v1641
      %v1658 = vsel %vm1578, %v1545, %v1642
      %v1659 = vsel %vm1579, %v1548, %v1643
      %v1660 = vsel %vm1580, %v1551, %v1644
      %v1661 = vsel %vm1581, %v1554, %v1645
      %v1662 = vsel %vm1582, %v1557, %v1646
      %v1663 = vsel %vm1583, %v1560, %v1647
      %v1664 = vsel %vm1584, %v1563, %v1648
      %v1665 = vsel %vm1585, %v1566, %v1649
      %v1666 = vsel %vm1586, %v1569, %v1650
      %v1667 = vld [vmem:[%s3] sm:$0xff]
      %v1668 = vld [vmem:[%s3 + $0x8] sm:$0xff]
      %v1669 = vld [vmem:[%s3 + $0x10] sm:$0xff]
      %v1670 = vld [vmem:[%s3 + $0x18] sm:$0xff]
      %v1671 = vld [vmem:[%s3 + $0x20] sm:$0xff]
      %v1672 = vld [vmem:[%s3 + $0x28] sm:$0xff]
      %v1673 = vld [vmem:[%s3 + $0x30] sm:$0xff]
      %v1674 = vld [vmem:[%s3 + $0x38] sm:$0xff]
      %v1675 = vld [vmem:[%s3 + $0x40] sm:$0xff]
      %v1676 = vld [vmem:[%s3 + $0x48] sm:$0xff]
      %v1677 = vld [vmem:[%s3 + $0x50] sm:$0xff]
      %v1678 = vld [vmem:[%s3 + $0x58] sm:$0xff]
      %v1679 = vld [vmem:[%s3 + $0x60] sm:$0xff]
      %v1680 = vld [vmem:[%s3 + $0x68] sm:$0x1]
      %v1682 = vsel %vm262, %v1651, 0
      %v1685 = vsel %vm262, %v1652, 0
      %v1688 = vsel %vm262, %v1653, 0
      %v1691 = vsel %vm262, %v1654, 0
      %v1694 = vsel %vm262, %v1655, 0
      %v1697 = vsel %vm262, %v1656, 0
      %v1700 = vsel %vm262, %v1657, 0
      %v1703 = vsel %vm262, %v1658, 0
      %v1706 = vsel %vm262, %v1659, 0
      %v1709 = vsel %vm262, %v1660, 0
      %v1712 = vsel %vm262, %v1661, 0
      %v1715 = vsel %vm262, %v1662, 0
      %v1718 = vsel %vm262, %v1663, 0
      %v1721 = vsel %vm262, %v1664, 0
      %v1724 = vsel %vm262, %v1665, 0
      %v1727 = vsel %vm262, %v1666, 0
      %v1730 = vsel %vm856, %v1680, 0
      %1732 = vmatpush.msra.mxu0 0.0
      %1733 = vmatpush.msra.mxu0 0.0
      %1734 = vmatpush.msra.mxu0 %v1730
      %1735 = vmatpush.msra.mxu0 %v1679
      %1736 = vmatpush.msra.mxu0 %v1678
      %1737 = vmatpush.msra.mxu0 %v1677
      %1738 = vmatpush.msra.mxu0 %v1676
      %1739 = vmatpush.msra.mxu0 %v1675
      %1740 = vmatpush.msra.mxu0 %v1674
      %1741 = vmatpush.msra.mxu0 %v1673
      %1742 = vmatpush.msra.mxu0 %v1672
      %1743 = vmatpush.msra.mxu0 %v1671
      %1744 = vmatpush.msra.mxu0 %v1670
      %1745 = vmatpush.msra.mxu0 %v1669
      %1746 = vmatpush.msra.mxu0 %v1668
      %1747 = vmatpush.msra.mxu0 %v1667
      %1748 = vmatmul.f32.gmra.mxu0 %v1682
      %v1749 = vpop.f32.mrf.mxu0
      %v1750 = vadd.f32 0.0, %v1749
      %1751 = vmatmul.f32.gmra.mxu0 %v1685
      %v1752 = vpop.f32.mrf.mxu0
      %v1753 = vadd.f32 0.0, %v1752
      %1754 = vmatmul.f32.gmra.mxu0 %v1688
      %v1755 = vpop.f32.mrf.mxu0
      %v1756 = vadd.f32 0.0, %v1755
      %1757 = vmatmul.f32.gmra.mxu0 %v1691
      %v1758 = vpop.f32.mrf.mxu0
      %v1759 = vadd.f32 0.0, %v1758
      %1760 = vmatmul.f32.gmra.mxu0 %v1694
      %v1761 = vpop.f32.mrf.mxu0
      %v1762 = vadd.f32 0.0, %v1761
      %1763 = vmatmul.f32.gmra.mxu0 %v1697
      %v1764 = vpop.f32.mrf.mxu0
      %v1765 = vadd.f32 0.0, %v1764
      %1766 = vmatmul.f32.gmra.mxu0 %v1700
      %v1767 = vpop.f32.mrf.mxu0
      %v1768 = vadd.f32 0.0, %v1767
      %1769 = vmatmul.f32.gmra.mxu0 %v1703
      %v1770 = vpop.f32.mrf.mxu0
      %v1771 = vadd.f32 0.0, %v1770
      %1772 = vmatmul.f32.gmra.mxu0 %v1706
      %v1773 = vpop.f32.mrf.mxu0
      %v1774 = vadd.f32 0.0, %v1773
      %1775 = vmatmul.f32.gmra.mxu0 %v1709
      %v1776 = vpop.f32.mrf.mxu0
      %v1777 = vadd.f32 0.0, %v1776
      %1778 = vmatmul.f32.gmra.mxu0 %v1712
      %v1779 = vpop.f32.mrf.mxu0
      %v1780 = vadd.f32 0.0, %v1779
      %1781 = vmatmul.f32.gmra.mxu0 %v1715
      %v1782 = vpop.f32.mrf.mxu0
      %v1783 = vadd.f32 0.0, %v1782
      %1784 = vmatmul.f32.gmra.mxu0 %v1718
      %v1785 = vpop.f32.mrf.mxu0
      %v1786 = vadd.f32 0.0, %v1785
      %1787 = vmatmul.f32.gmra.mxu0 %v1721
      %v1788 = vpop.f32.mrf.mxu0
      %v1789 = vadd.f32 0.0, %v1788
      %1790 = vmatmul.f32.gmra.mxu0 %v1724
      %v1791 = vpop.f32.mrf.mxu0
      %v1792 = vadd.f32 0.0, %v1791
      %1793 = vmatmul.f32.gmra.mxu0 %v1727
      %v1794 = vpop.f32.mrf.mxu0
      %v1795 = vadd.f32 0.0, %v1794
      %1796 = vdwg.mxu0
      %v1797 = vmul.f32 %v1750, 0.013333334
      %v1798 = vmul.f32 %v1753, 0.013333334
      %v1799 = vmul.f32 %v1756, 0.013333334
      %v1800 = vmul.f32 %v1759, 0.013333334
      %v1801 = vmul.f32 %v1762, 0.013333334
      %v1802 = vmul.f32 %v1765, 0.013333334
      %v1803 = vmul.f32 %v1768, 0.013333334
      %v1804 = vmul.f32 %v1771, 0.013333334
      %v1805 = vmul.f32 %v1774, 0.013333334
      %v1806 = vmul.f32 %v1777, 0.013333334
      %v1807 = vmul.f32 %v1780, 0.013333334
      %v1808 = vmul.f32 %v1783, 0.013333334
      %v1809 = vmul.f32 %v1786, 0.013333334
      %v1810 = vmul.f32 %v1789, 0.013333334
      %v1811 = vmul.f32 %v1792, 0.013333334
      %v1812 = vmul.f32 %v1795, 0.013333334
      %v1813 = vld [vmem:[%s4] sm:$0xff]
      %v1814 = vld [vmem:[%s4 + $0x8] sm:$0xff]
      %v1815 = vld [vmem:[%s4 + $0x10] sm:$0xff]
      %v1816 = vld [vmem:[%s4 + $0x18] sm:$0xff]
      %v1817 = vld [vmem:[%s4 + $0x20] sm:$0xff]
      %v1818 = vld [vmem:[%s4 + $0x28] sm:$0xff]
      %v1819 = vld [vmem:[%s4 + $0x30] sm:$0xff]
      %v1820 = vld [vmem:[%s4 + $0x38] sm:$0xff]
      %v1821 = vld [vmem:[%s4 + $0x40] sm:$0xff]
      %v1822 = vld [vmem:[%s4 + $0x48] sm:$0xff]
      %v1823 = vld [vmem:[%s4 + $0x50] sm:$0xff]
      %v1824 = vld [vmem:[%s4 + $0x58] sm:$0xff]
      %v1825 = vld [vmem:[%s4 + $0x60] sm:$0xff]
      %v1826 = vld [vmem:[%s4 + $0x68] sm:$0xff]
      %v1827 = vld [vmem:[%s4 + $0x70] sm:$0xff]
      %v1828 = vld [vmem:[%s4 + $0x78] sm:$0xff]
      %v1829 = vld [vmem:[%s5] sm:$0xff]
      %v1830 = vld [vmem:[%s5 + $0x8] sm:$0xff]
      %v1831 = vld [vmem:[%s5 + $0x10] sm:$0xff]
      %v1832 = vld [vmem:[%s5 + $0x18] sm:$0xff]
      %v1833 = vld [vmem:[%s5 + $0x20] sm:$0xff]
      %v1834 = vld [vmem:[%s5 + $0x28] sm:$0xff]
      %v1835 = vld [vmem:[%s5 + $0x30] sm:$0xff]
      %v1836 = vld [vmem:[%s5 + $0x38] sm:$0xff]
      %v1837 = vld [vmem:[%s5 + $0x40] sm:$0xff]
      %v1838 = vld [vmem:[%s5 + $0x48] sm:$0xff]
      %v1839 = vld [vmem:[%s5 + $0x50] sm:$0xff]
      %v1840 = vld [vmem:[%s5 + $0x58] sm:$0xff]
      %v1841 = vld [vmem:[%s5 + $0x60] sm:$0xff]
      %v1842 = vld [vmem:[%s5 + $0x68] sm:$0xff]
      %v1843 = vld [vmem:[%s5 + $0x70] sm:$0xff]
      %v1844 = vld [vmem:[%s5 + $0x78] sm:$0xff]
      %1846 = vset.pattern.permute.xlu0 0
      %1847 = vperm.xlu0 %1846, %v1829
      %v1848 = vpop.permute.xlu0 %1847
      %1851 = vset.pattern.permute.xlu0 0
      %1852 = vperm.xlu0 %1851, %v1830
      %v1853 = vpop.permute.xlu0 %1852
      %1856 = vset.pattern.permute.xlu0 0
      %1857 = vperm.xlu0 %1856, %v1831
      %v1858 = vpop.permute.xlu0 %1857
      %1861 = vset.pattern.permute.xlu0 0
      %1862 = vperm.xlu0 %1861, %v1832
      %v1863 = vpop.permute.xlu0 %1862
      %1866 = vset.pattern.permute.xlu0 0
      %1867 = vperm.xlu0 %1866, %v1833
      %v1868 = vpop.permute.xlu0 %1867
      %1871 = vset.pattern.permute.xlu0 0
      %1872 = vperm.xlu0 %1871, %v1834
      %v1873 = vpop.permute.xlu0 %1872
      %1876 = vset.pattern.permute.xlu0 0
      %1877 = vperm.xlu0 %1876, %v1835
      %v1878 = vpop.permute.xlu0 %1877
      %1881 = vset.pattern.permute.xlu0 0
      %1882 = vperm.xlu0 %1881, %v1836
      %v1883 = vpop.permute.xlu0 %1882
      %1886 = vset.pattern.permute.xlu0 0
      %1887 = vperm.xlu0 %1886, %v1837
      %v1888 = vpop.permute.xlu0 %1887
      %1891 = vset.pattern.permute.xlu0 0
      %1892 = vperm.xlu0 %1891, %v1838
      %v1893 = vpop.permute.xlu0 %1892
      %1896 = vset.pattern.permute.xlu0 0
      %1897 = vperm.xlu0 %1896, %v1839
      %v1898 = vpop.permute.xlu0 %1897
      %1901 = vset.pattern.permute.xlu0 0
      %1902 = vperm.xlu0 %1901, %v1840
      %v1903 = vpop.permute.xlu0 %1902
      %1906 = vset.pattern.permute.xlu0 0
      %1907 = vperm.xlu0 %1906, %v1841
      %v1908 = vpop.permute.xlu0 %1907
      %1911 = vset.pattern.permute.xlu0 0
      %1912 = vperm.xlu0 %1911, %v1842
      %v1913 = vpop.permute.xlu0 %1912
      %1916 = vset.pattern.permute.xlu0 0
      %1917 = vperm.xlu0 %1916, %v1843
      %v1918 = vpop.permute.xlu0 %1917
      %1921 = vset.pattern.permute.xlu0 0
      %1922 = vperm.xlu0 %1921, %v1844
      %v1923 = vpop.permute.xlu0 %1922
      %1925 = vmatpush.msra.mxu0 %v1812
      %1926 = vmatpush.msra.mxu0 %v1811
      %1927 = vmatpush.msra.mxu0 %v1810
      %1928 = vmatpush.msra.mxu0 %v1809
      %1929 = vmatpush.msra.mxu0 %v1808
      %1930 = vmatpush.msra.mxu0 %v1807
      %1931 = vmatpush.msra.mxu0 %v1806
      %1932 = vmatpush.msra.mxu0 %v1805
      %1933 = vmatpush.msra.mxu0 %v1804
      %1934 = vmatpush.msra.mxu0 %v1803
      %1935 = vmatpush.msra.mxu0 %v1802
      %1936 = vmatpush.msra.mxu0 %v1801
      %1937 = vmatpush.msra.mxu0 %v1800
      %1938 = vmatpush.msra.mxu0 %v1799
      %1939 = vmatpush.msra.mxu0 %v1798
      %1940 = vmatpush.msra.mxu0 %v1797
      %1941 = vmatmul.f32.gmra.mxu0 %v1813
      %v1942 = vpop.f32.mrf.mxu0
      %v1943 = vadd.f32 %v1848, %v1942
      %1944 = vmatmul.f32.gmra.mxu0 %v1814
      %v1945 = vpop.f32.mrf.mxu0
      %v1946 = vadd.f32 %v1853, %v1945
      %1947 = vmatmul.f32.gmra.mxu0 %v1815
      %v1948 = vpop.f32.mrf.mxu0
      %v1949 = vadd.f32 %v1858, %v1948
      %1950 = vmatmul.f32.gmra.mxu0 %v1816
      %v1951 = vpop.f32.mrf.mxu0
      %v1952 = vadd.f32 %v1863, %v1951
      %1953 = vmatmul.f32.gmra.mxu0 %v1817
      %v1954 = vpop.f32.mrf.mxu0
      %v1955 = vadd.f32 %v1868, %v1954
      %1956 = vmatmul.f32.gmra.mxu0 %v1818
      %v1957 = vpop.f32.mrf.mxu0
      %v1958 = vadd.f32 %v1873, %v1957
      %1959 = vmatmul.f32.gmra.mxu0 %v1819
      %v1960 = vpop.f32.mrf.mxu0
      %v1961 = vadd.f32 %v1878, %v1960
      %1962 = vmatmul.f32.gmra.mxu0 %v1820
      %v1963 = vpop.f32.mrf.mxu0
      %v1964 = vadd.f32 %v1883, %v1963
      %1965 = vmatmul.f32.gmra.mxu0 %v1821
      %v1966 = vpop.f32.mrf.mxu0
      %v1967 = vadd.f32 %v1888, %v1966
      %1968 = vmatmul.f32.gmra.mxu0 %v1822
      %v1969 = vpop.f32.mrf.mxu0
      %v1970 = vadd.f32 %v1893, %v1969
      %1971 = vmatmul.f32.gmra.mxu0 %v1823
      %v1972 = vpop.f32.mrf.mxu0
      %v1973 = vadd.f32 %v1898, %v1972
      %1974 = vmatmul.f32.gmra.mxu0 %v1824
      %v1975 = vpop.f32.mrf.mxu0
      %v1976 = vadd.f32 %v1903, %v1975
      %1977 = vmatmul.f32.gmra.mxu0 %v1825
      %v1978 = vpop.f32.mrf.mxu0
      %v1979 = vadd.f32 %v1908, %v1978
      %1980 = vmatmul.f32.gmra.mxu0 %v1826
      %v1981 = vpop.f32.mrf.mxu0
      %v1982 = vadd.f32 %v1913, %v1981
      %1983 = vmatmul.f32.gmra.mxu0 %v1827
      %v1984 = vpop.f32.mrf.mxu0
      %v1985 = vadd.f32 %v1918, %v1984
      %1986 = vmatmul.f32.gmra.mxu0 %v1828
      %v1987 = vpop.f32.mrf.mxu0
      %v1988 = vadd.f32 %v1923, %v1987
      %1989 = vdwg.mxu0
      %s1990 = scalar_lea.vmem %s258, 128
      %1991 = vst.msk [vmem:[%s1990] sm:$0xff] %vm1118, %v1943
      %1992 = vst.msk [vmem:[%s1990 + $0x8] sm:$0xff] %vm1118, %v1946
      %1993 = vst.msk [vmem:[%s1990 + $0x10] sm:$0xff] %vm1118, %v1949
      %1994 = vst.msk [vmem:[%s1990 + $0x18] sm:$0xff] %vm1118, %v1952
      %1995 = vst.msk [vmem:[%s1990 + $0x20] sm:$0xff] %vm1118, %v1955
      %1996 = vst.msk [vmem:[%s1990 + $0x28] sm:$0xff] %vm1118, %v1958
      %1997 = vst.msk [vmem:[%s1990 + $0x30] sm:$0xff] %vm1118, %v1961
      %1998 = vst.msk [vmem:[%s1990 + $0x38] sm:$0xff] %vm1118, %v1964
      %1999 = vst.msk [vmem:[%s1990 + $0x40] sm:$0xff] %vm1118, %v1967
      %2000 = vst.msk [vmem:[%s1990 + $0x48] sm:$0xff] %vm1118, %v1970
      %2001 = vst.msk [vmem:[%s1990 + $0x50] sm:$0xff] %vm1118, %v1973
      %2002 = vst.msk [vmem:[%s1990 + $0x58] sm:$0xff] %vm1118, %v1976
      %2003 = vst.msk [vmem:[%s1990 + $0x60] sm:$0xff] %vm1118, %v1979
      %2004 = vst.msk [vmem:[%s1990 + $0x68] sm:$0xff] %vm1118, %v1982
      %2005 = vst.msk [vmem:[%s1990 + $0x70] sm:$0xff] %vm1118, %v1985
      %2006 = vst.msk [vmem:[%s1990 + $0x78] sm:$0xff] %vm1118, %v1988
      %s2007 = smul.u32 2, %s17
      %p2008 = scmp.lt.s32.totalorder %s2007, 7
      %s2009 = scalar_select %p2008, %s2007, 7
      %s2010 = smul.addr %s2009, 16
      %s2011 = smul.addr %s2010, 8
      %s2012 = scalar_lea.vmem %s6, %s2011
      // Predicated region
      $region45: #{tpu_custom_call.1} parent=43 // pred_check
        %p2013 = pneg %p166
      $region46: #{tpu_custom_call.1} parent=43 // pred_check_branch
        %2015 = sbr.rel (%p2013) target = $region48
      $region47: #{tpu_custom_call.1} parent=43 // pred_region
        %s2016 = smul.u32 2, %s17
      $region48: #{tpu_custom_call.1} parent=43 // pred_fallthru
        _
    $region44: #{tpu_custom_call.1} parent=5 // pred_fallthru
      _
    %p2017 = scmp.le.s32.totalorder 2, %s12
    // Predicated region
    $region49: #{tpu_custom_call.1} parent=5 // pred_check
      %p2018 = pneg %p2017
    $region50: #{tpu_custom_call.1} parent=5 // pred_check_branch
      %2020 = sbr.rel (%p2018) target = $region52
    $region51: #{tpu_custom_call.1} parent=5 // pred_region
      %s2021 = ssub.s32 %s12, 2
      // Predicated region
      $region53: #{tpu_custom_call.1} parent=51 // pred_check
        %p2022 = pneg %p172
      $region54: #{tpu_custom_call.1} parent=51 // pred_check_branch
        %2024 = sbr.rel (%p2022) target = $region56
      $region55: #{tpu_custom_call.1} parent=51 // pred_region
        %s2025 = smul.u32 2, %s18
        %p2026 = scmp.lt.s32.totalorder %s2025, 7
        %s2027 = scalar_select %p2026, %s2025, 7
        %s2028 = smul.addr %s2027, 16
        %s2029 = smul.addr %s2028, 8
        %s2030 = scalar_lea.vmem %s6, %s2029
      $region56: #{tpu_custom_call.1} parent=51 // pred_fallthru
        _
    $region52: #{tpu_custom_call.1} parent=5 // pred_fallthru
      _
  $region6: #{tpu_custom_call.1} parent=0 // loop_footer
    %s16 = sadd.s32 1, %s12
  $region7: #{tpu_custom_call.1} parent=0 // loop_footer_branch
    %11 = sbr.rel target = $region3
  $region8: #{tpu_custom_call.1} parent=0 // loop_exit
    _

</llo_original>
